<compile_context>
chip_gen: v5e
topology: v5e:2x2
jax: 0.10.0
libtpu: 0.0.40
codegen_flags: <defaults>
</compile_context>

<pallas_src>
import math

import jax
import jax.numpy as jnp
from jax.experimental import pallas as pl
from jax.experimental.pallas import tpu as pltpu


# ----------------------------- model config ---------------------------------
B = 2          # batch
S = 8          # seq_len
D = 32         # embed_dim / model_dim
H = 4          # num_of_heads
HD = D // H    # head_dim
FF = 4 * D     # feed-forward width
NUM_LAYERS = 2
LN_EPS = 1e-5

# rows of the packed per-layer vector slab [9, D]
_BQ, _BK, _BV, _BO, _G1, _BE1, _B2, _G2, _BE2 = range(9)


# ------------------------------ Pallas kernel --------------------------------
def _layernorm(y, gamma, beta):
    mu = jnp.mean(y, axis=-1, keepdims=True)
    var = jnp.mean((y - mu) * (y - mu), axis=-1, keepdims=True)
    return (y - mu) * jax.lax.rsqrt(var + LN_EPS) * gamma + beta


def encoder_kernel(x_ref, wqkv_ref, wo_ref, w1_ref, w2_ref, vecs_ref, b1_ref,
                   o_ref):
    """One grid step == one encoder layer; activation carried in o_ref."""
    layer = pl.program_id(0)

    # On the first layer, seed the resident output block with the input.
    @pl.when(layer == 0)
    def _():
        o_ref[...] = x_ref[...]

    x = o_ref[...]                                   # [B*S, D]
    vecs = vecs_ref[0]                               # [9, D]

    # Folded q/k/v projections: one [B*S, D] @ [D, 3D] matmul.
    qkv = jnp.dot(x, wqkv_ref[0], preferred_element_type=jnp.float32)
    q = (qkv[:, 0 * D:1 * D] + vecs[_BQ:_BQ + 1, :]).reshape(B, S, D)
    k = (qkv[:, 1 * D:2 * D] + vecs[_BK:_BK + 1, :]).reshape(B, S, D)
    v = (qkv[:, 2 * D:3 * D] + vecs[_BV:_BV + 1, :]).reshape(B, S, D)

    # Per-head scaled dot-product attention, batched over the batch dim
    # (no explicit .T — contraction on last axes via einsum/dot_general).
    scale = 1.0 / math.sqrt(HD)
    head_outs = []
    for h in range(H):
        qh = q[:, :, h * HD:(h + 1) * HD]            # [B, S, HD]
        kh = k[:, :, h * HD:(h + 1) * HD]
        vh = v[:, :, h * HD:(h + 1) * HD]
        s = jnp.einsum("bqd,bkd->bqk", qh, kh,
                       preferred_element_type=jnp.float32) * scale
        m = jnp.max(s, axis=-1, keepdims=True)
        p = jnp.exp(s - m)
        attn = p * pl.reciprocal(jnp.sum(p, axis=-1, keepdims=True))
        head_outs.append(jnp.einsum("bqk,bkd->bqd", attn, vh,
                                    preferred_element_type=jnp.float32))
    ctx = jnp.concatenate(head_outs, axis=-1).reshape(B * S, D)

    # out-projection + residual + LayerNorm1
    attn_out = jnp.dot(ctx, wo_ref[0],
                       preferred_element_type=jnp.float32) + vecs[_BO:_BO + 1, :]
    h1 = _layernorm(attn_out + x, vecs[_G1:_G1 + 1, :], vecs[_BE1:_BE1 + 1, :])

    # position-wise feed-forward (dropout = identity in eval)
    ff = jnp.dot(h1, w1_ref[0], preferred_element_type=jnp.float32) + b1_ref[0]
    ff = jnp.maximum(ff, 0.0)
    ff = jnp.dot(ff, w2_ref[0],
                 preferred_element_type=jnp.float32) + vecs[_B2:_B2 + 1, :]

    # residual + LayerNorm2; result stays resident for the next layer.
    o_ref[...] = _layernorm(ff + h1, vecs[_G2:_G2 + 1, :], vecs[_BE2:_BE2 + 1, :])


# ------------------------- wrapper / param packing ----------------------------
def pack_params(layer_params):
    """Fold the q/k/v projection chains and pack per-layer params into slabs."""
    wqkv = jnp.stack([
        jnp.concatenate([p["wpq"] @ p["wq"],
                         p["wpk"] @ p["wk"],
                         p["wpv"] @ p["wv"]], axis=1)        # [D, 3D]
        for p in layer_params])                               # [L, D, 3D]
    wo = jnp.stack([p["wo"] for p in layer_params])           # [L, D, D]
    w1 = jnp.stack([p["w1"] for p in layer_params])           # [L, D, FF]
    w2 = jnp.stack([p["w2"] for p in layer_params])           # [L, FF, D]
    vecs = jnp.stack([
        jnp.concatenate([p["bq"], p["bk"], p["bv"], p["bo"],
                         p["g1"], p["be1"], p["b2"], p["g2"], p["be2"]],
                        axis=0)                               # [9, D]
        for p in layer_params])                               # [L, 9, D]
    b1 = jnp.stack([p["b1"] for p in layer_params])           # [L, 1, FF]
    return wqkv, wo, w1, w2, vecs, b1


@jax.jit
def encoder_forward_pallas(x, wqkv, wo, w1, w2, vecs, b1):
    """x: [B, S, D] float32; packed params stacked along the layer axis."""
    xf = x.reshape(B * S, D)
    out = pl.pallas_call(
        encoder_kernel,
        out_shape=jax.ShapeDtypeStruct((B * S, D), jnp.float32),
        grid_spec=pltpu.PrefetchScalarGridSpec(
            num_scalar_prefetch=0,
            grid=(NUM_LAYERS,),
            in_specs=[
                pl.BlockSpec((B * S, D), lambda l: (0, 0)),        # x (read once)
                pl.BlockSpec((1, D, 3 * D), lambda l: (l, 0, 0)),  # wqkv
                pl.BlockSpec((1, D, D), lambda l: (l, 0, 0)),      # wo
                pl.BlockSpec((1, D, FF), lambda l: (l, 0, 0)),     # w1
                pl.BlockSpec((1, FF, D), lambda l: (l, 0, 0)),     # w2
                pl.BlockSpec((1, 9, D), lambda l: (l, 0, 0)),      # vector slab
                pl.BlockSpec((1, 1, FF), lambda l: (l, 0, 0)),     # b1
            ],
            out_specs=pl.BlockSpec((B * S, D), lambda l: (0, 0)),  # resident carry
        ),
        compiler_params=pltpu.CompilerParams(
            dimension_semantics=("arbitrary",)),
    )(xf, wqkv, wo, w1, w2, vecs, b1)
    return out.reshape(B, S, D)


# ------------------------- pure-JAX reference --------------------------------
def encoder_layer_ref(x, p):
    xq = x @ p["wpq"]
    xk = x @ p["wpk"]
    xv = x @ p["wpv"]
    q = xq @ p["wq"] + p["bq"]
    k = xk @ p["wk"] + p["bk"]
    v = xv @ p["wv"] + p["bv"]
    qh = q.reshape(B, S, H, HD)
    kh = k.reshape(B, S, H, HD)
    vh = v.reshape(B, S, H, HD)
    scores = jnp.einsum("bqhd,bkhd->bhqk", qh, kh) / math.sqrt(HD)
    attn = jax.nn.softmax(scores, axis=-1)
    ctx = jnp.einsum("bhqk,bkhd->bqhd", attn, vh).reshape(B, S, D)
    attn_out = ctx @ p["wo"] + p["bo"]

    def ln(y, g, b):
        mu = jnp.mean(y, axis=-1, keepdims=True)
        var = jnp.mean((y - mu) ** 2, axis=-1, keepdims=True)
        return (y - mu) / jnp.sqrt(var + LN_EPS) * g + b

    h1 = ln(attn_out + x, p["g1"], p["be1"])
    ff = jnp.maximum(h1 @ p["w1"] + p["b1"], 0.0) @ p["w2"] + p["b2"]
    return ln(ff + h1, p["g2"], p["be2"])


def encoder_forward_ref(x, layer_params):
    out = x
    for p in layer_params:
        out = encoder_layer_ref(out, p)
    return out


# --------------------------- deterministic init ------------------------------
def _uniform(key, shape, fan_in):
    bound = 1.0 / math.sqrt(fan_in)
    return jax.random.uniform(key, shape, jnp.float32, -bound, bound)


def make_layer_params(key):
    ks = jax.random.split(key, 16)
    return {
        # _linear_projection: Linear(D, HD, bias=False), fresh per q/k/v call
        "wpq": _uniform(ks[0], (D, HD), D),
        "wpk": _uniform(ks[1], (D, HD), D),
        "wpv": _uniform(ks[2], (D, HD), D),
        # MHA in-proj HD -> D (with bias), out-proj D -> D (with bias)
        "wq": _uniform(ks[3], (HD, D), HD), "bq": _uniform(ks[4], (1, D), HD),
        "wk": _uniform(ks[5], (HD, D), HD), "bk": _uniform(ks[6], (1, D), HD),
        "wv": _uniform(ks[7], (HD, D), HD), "bv": _uniform(ks[8], (1, D), HD),
        "wo": _uniform(ks[9], (D, D), D),   "bo": _uniform(ks[10], (1, D), D),
        # LayerNorm1 (PyTorch default init: gamma=1, beta=0)
        "g1": jnp.ones((1, D), jnp.float32), "be1": jnp.zeros((1, D), jnp.float32),
        # FFN
        "w1": _uniform(ks[11], (D, FF), D),  "b1": _uniform(ks[12], (1, FF), D),
        "w2": _uniform(ks[13], (FF, D), FF), "b2": _uniform(ks[14], (1, D), FF),
        # LayerNorm2
        "g2": jnp.ones((1, D), jnp.float32), "be2": jnp.zeros((1, D), jnp.float32),
    }


# --------------------------------- main ---------------------------------------
if __name__ == "__main__":
    root = jax.random.PRNGKey(0)
    k_x, *k_layers = jax.random.split(root, 1 + NUM_LAYERS)

    x = jax.random.normal(k_x, (B, S, D), jnp.float32)
    layer_params = [make_layer_params(k) for k in k_layers]

    packed = pack_params(layer_params)
    out = encoder_forward_pallas(x, *packed)
    out = jax.block_until_ready(out)

    ref = jax.block_until_ready(encoder_forward_ref(x, layer_params))
    assert out.shape == (B, S, D)
    assert jnp.allclose(out, ref, atol=1e-4, rtol=1e-4), (
        float(jnp.max(jnp.abs(out - ref))))

    print("KERNEL_OK")
</pallas_src>

<mosaic_0001>
module attributes {stable_mosaic.version = 11 : i64} {
  func.func @encoder_kernel(%arg0: i32, %arg1: memref<16x32xf32, #tpu.memory_space<vmem>>, %arg2: memref<1x32x96xf32, #tpu.memory_space<vmem>>, %arg3: memref<1x32x32xf32, #tpu.memory_space<vmem>>, %arg4: memref<1x32x128xf32, #tpu.memory_space<vmem>>, %arg5: memref<1x128x32xf32, #tpu.memory_space<vmem>>, %arg6: memref<1x9x32xf32, #tpu.memory_space<vmem>>, %arg7: memref<1x1x128xf32, #tpu.memory_space<vmem>>, %arg8: memref<16x32xf32, #tpu.memory_space<vmem>>) attributes {dimension_semantics = [#tpu.dimension_semantics<arbitrary>], iteration_bounds = array<i64: 2>, scalar_prefetch = 0 : i64, scratch_operands = 0 : i64, tpu.core_type = #tpu.core_type<tc>, window_params = [{pipeline_mode = #tpu.pipeline_mode<synchronous>, transform_indices = @transform_0, window_bounds = array<i64: 16, 32>}, {transform_indices = @transform_1, window_bounds = array<i64: 1, 32, 96>}, {transform_indices = @transform_2, window_bounds = array<i64: 1, 32, 32>}, {transform_indices = @transform_3, window_bounds = array<i64: 1, 32, 128>}, {transform_indices = @transform_4, window_bounds = array<i64: 1, 128, 32>}, {transform_indices = @transform_5, window_bounds = array<i64: 1, 9, 32>}, {transform_indices = @transform_6, window_bounds = array<i64: 1, 1, 128>}, {pipeline_mode = #tpu.pipeline_mode<synchronous>, transform_indices = @transform_7, window_bounds = array<i64: 16, 32>}]} {
    %c0_i32 = arith.constant 0 : i32
    %0 = arith.cmpi eq, %arg0, %c0_i32 : i32
    %1 = arith.extui %0 : i1 to i32
    %c0_i32_0 = arith.constant 0 : i32
    %2 = arith.cmpi ne, %1, %c0_i32_0 : i32
    scf.if %2 {
      %c0_56 = arith.constant 0 : index
      %c0_57 = arith.constant 0 : index
      %170 = vector.load %arg1[%c0_56, %c0_57] : memref<16x32xf32, #tpu.memory_space<vmem>>, vector<16x32xf32>
      %c0_58 = arith.constant 0 : index
      %c0_59 = arith.constant 0 : index
      %171 = vector.load %arg8[%c0_58, %c0_59] : memref<16x32xf32, #tpu.memory_space<vmem>>, vector<16x32xf32>
      tpu.vector_store %arg8[%c0_58, %c0_59], %170 {strides = array<i32>} : memref<16x32xf32, #tpu.memory_space<vmem>>, vector<16x32xf32>,
    } else {
    }
    %c0 = arith.constant 0 : index
    %c0_1 = arith.constant 0 : index
    %3 = vector.load %arg8[%c0, %c0_1] : memref<16x32xf32, #tpu.memory_space<vmem>>, vector<16x32xf32>
    %c0_2 = arith.constant 0 : index
    %c0_3 = arith.constant 0 : index
    %c0_4 = arith.constant 0 : index
    %4 = vector.load %arg6[%c0_2, %c0_3, %c0_4] : memref<1x9x32xf32, #tpu.memory_space<vmem>>, vector<1x9x32xf32>
    %5 = vector.shape_cast %4 : vector<1x9x32xf32> to vector<9x32xf32>
    %c0_5 = arith.constant 0 : index
    %c0_6 = arith.constant 0 : index
    %c0_7 = arith.constant 0 : index
    %6 = vector.load %arg2[%c0_5, %c0_6, %c0_7] : memref<1x32x96xf32, #tpu.memory_space<vmem>>, vector<1x32x96xf32>
    %7 = vector.shape_cast %6 : vector<1x32x96xf32> to vector<32x96xf32>
    %cst = arith.constant dense<0.000000e+00> : vector<16x96xf32>
    %8 = tpu.matmul %3, %7, %cst {dimension_numbers = #tpu.dot_dimension_numbers<[1], [0], [0], [1], [0, 0, 1, 1], [], []>} : vector<16x32xf32>, vector<32x96xf32>, vector<16x96xf32> -> vector<16x96xf32>
    %9 = vector.extract_strided_slice %8 {offsets = [0, 0], sizes = [16, 32], strides = [1, 1]} : vector<16x96xf32> to vector<16x32xf32>
    %10 = vector.extract_strided_slice %5 {offsets = [0, 0], sizes = [1, 32], strides = [1, 1]} : vector<9x32xf32> to vector<1x32xf32>
    %11 = vector.broadcast %10 : vector<1x32xf32> to vector<16x32xf32>
    %12 = arith.addf %9, %11 : vector<16x32xf32>
    %13 = vector.shape_cast %12 : vector<16x32xf32> to vector<2x8x32xf32>
    %14 = vector.extract_strided_slice %8 {offsets = [0, 32], sizes = [16, 32], strides = [1, 1]} : vector<16x96xf32> to vector<16x32xf32>
    %15 = vector.extract_strided_slice %5 {offsets = [1, 0], sizes = [1, 32], strides = [1, 1]} : vector<9x32xf32> to vector<1x32xf32>
    %16 = vector.broadcast %15 : vector<1x32xf32> to vector<16x32xf32>
    %17 = arith.addf %14, %16 : vector<16x32xf32>
    %18 = vector.shape_cast %17 : vector<16x32xf32> to vector<2x8x32xf32>
    %19 = vector.extract_strided_slice %8 {offsets = [0, 64], sizes = [16, 32], strides = [1, 1]} : vector<16x96xf32> to vector<16x32xf32>
    %20 = vector.extract_strided_slice %5 {offsets = [2, 0], sizes = [1, 32], strides = [1, 1]} : vector<9x32xf32> to vector<1x32xf32>
    %21 = vector.broadcast %20 : vector<1x32xf32> to vector<16x32xf32>
    %22 = arith.addf %19, %21 : vector<16x32xf32>
    %23 = vector.shape_cast %22 : vector<16x32xf32> to vector<2x8x32xf32>
    %24 = vector.extract_strided_slice %13 {offsets = [0, 0, 0], sizes = [2, 8, 8], strides = [1, 1, 1]} : vector<2x8x32xf32> to vector<2x8x8xf32>
    %25 = vector.extract_strided_slice %18 {offsets = [0, 0, 0], sizes = [2, 8, 8], strides = [1, 1, 1]} : vector<2x8x32xf32> to vector<2x8x8xf32>
    %26 = vector.extract_strided_slice %23 {offsets = [0, 0, 0], sizes = [2, 8, 8], strides = [1, 1, 1]} : vector<2x8x32xf32> to vector<2x8x8xf32>
    "tpu.trace_start"() <{level = 10 : i32, message = "bqd,bkd->bqk"}> : () -> ()
    %cst_8 = arith.constant dense<0.000000e+00> : vector<2x8x8xf32>
    %27 = tpu.matmul %24, %25, %cst_8 {dimension_numbers = #tpu.dot_dimension_numbers<[2], [2], [1], [1], [0, 0, 0, 1, 1, 1], [0], [0]>} : vector<2x8x8xf32>, vector<2x8x8xf32>, vector<2x8x8xf32> -> vector<2x8x8xf32>
    "tpu.trace_stop"() : () -> ()
    %cst_9 = arith.constant 0.353553385 : f32
    %28 = vector.broadcast %cst_9 : f32 to vector<2x8x8xf32>
    %29 = arith.mulf %27, %28 : vector<2x8x8xf32>
    %cst_10 = arith.constant dense<0xFF800000> : vector<2x8xf32>
    %30 = vector.multi_reduction <maximumf>, %29, %cst_10 [2] : vector<2x8x8xf32> to vector<2x8xf32>
    %31 = vector.shape_cast %30 : vector<2x8xf32> to vector<2x8x1xf32>
    %32 = vector.broadcast %31 : vector<2x8x1xf32> to vector<2x8x8xf32>
    %33 = arith.subf %29, %32 : vector<2x8x8xf32>
    %34 = math.exp %33 : vector<2x8x8xf32>
    %cst_11 = arith.constant dense<0.000000e+00> : vector<2x8xf32>
    %35 = vector.multi_reduction <add>, %34, %cst_11 [2] : vector<2x8x8xf32> to vector<2x8xf32>
    %36 = vector.shape_cast %35 : vector<2x8xf32> to vector<2x8x1xf32>
    %37 = tpu.reciprocal %36 : vector<2x8x1xf32> -> vector<2x8x1xf32>
    %38 = vector.broadcast %37 : vector<2x8x1xf32> to vector<2x8x8xf32>
    %39 = arith.mulf %34, %38 : vector<2x8x8xf32>
    "tpu.trace_start"() <{level = 10 : i32, message = "bqk,bkd->bqd"}> : () -> ()
    %cst_12 = arith.constant dense<0.000000e+00> : vector<2x8x8xf32>
    %40 = tpu.matmul %39, %26, %cst_12 {dimension_numbers = #tpu.dot_dimension_numbers<[2], [1], [1], [2], [0, 0, 0, 1, 1, 2], [0], [0]>} : vector<2x8x8xf32>, vector<2x8x8xf32>, vector<2x8x8xf32> -> vector<2x8x8xf32>
    "tpu.trace_stop"() : () -> ()
    %41 = vector.extract_strided_slice %13 {offsets = [0, 0, 8], sizes = [2, 8, 8], strides = [1, 1, 1]} : vector<2x8x32xf32> to vector<2x8x8xf32>
    %42 = vector.extract_strided_slice %18 {offsets = [0, 0, 8], sizes = [2, 8, 8], strides = [1, 1, 1]} : vector<2x8x32xf32> to vector<2x8x8xf32>
    %43 = vector.extract_strided_slice %23 {offsets = [0, 0, 8], sizes = [2, 8, 8], strides = [1, 1, 1]} : vector<2x8x32xf32> to vector<2x8x8xf32>
    "tpu.trace_start"() <{level = 10 : i32, message = "bqd,bkd->bqk"}> : () -> ()
    %cst_13 = arith.constant dense<0.000000e+00> : vector<2x8x8xf32>
    %44 = tpu.matmul %41, %42, %cst_13 {dimension_numbers = #tpu.dot_dimension_numbers<[2], [2], [1], [1], [0, 0, 0, 1, 1, 1], [0], [0]>} : vector<2x8x8xf32>, vector<2x8x8xf32>, vector<2x8x8xf32> -> vector<2x8x8xf32>
    "tpu.trace_stop"() : () -> ()
    %cst_14 = arith.constant 0.353553385 : f32
    %45 = vector.broadcast %cst_14 : f32 to vector<2x8x8xf32>
    %46 = arith.mulf %44, %45 : vector<2x8x8xf32>
    %cst_15 = arith.constant dense<0xFF800000> : vector<2x8xf32>
    %47 = vector.multi_reduction <maximumf>, %46, %cst_15 [2] : vector<2x8x8xf32> to vector<2x8xf32>
    %48 = vector.shape_cast %47 : vector<2x8xf32> to vector<2x8x1xf32>
    %49 = vector.broadcast %48 : vector<2x8x1xf32> to vector<2x8x8xf32>
    %50 = arith.subf %46, %49 : vector<2x8x8xf32>
    %51 = math.exp %50 : vector<2x8x8xf32>
    %cst_16 = arith.constant dense<0.000000e+00> : vector<2x8xf32>
    %52 = vector.multi_reduction <add>, %51, %cst_16 [2] : vector<2x8x8xf32> to vector<2x8xf32>
    %53 = vector.shape_cast %52 : vector<2x8xf32> to vector<2x8x1xf32>
    %54 = tpu.reciprocal %53 : vector<2x8x1xf32> -> vector<2x8x1xf32>
    %55 = vector.broadcast %54 : vector<2x8x1xf32> to vector<2x8x8xf32>
    %56 = arith.mulf %51, %55 : vector<2x8x8xf32>
    "tpu.trace_start"() <{level = 10 : i32, message = "bqk,bkd->bqd"}> : () -> ()
    %cst_17 = arith.constant dense<0.000000e+00> : vector<2x8x8xf32>
    %57 = tpu.matmul %56, %43, %cst_17 {dimension_numbers = #tpu.dot_dimension_numbers<[2], [1], [1], [2], [0, 0, 0, 1, 1, 2], [0], [0]>} : vector<2x8x8xf32>, vector<2x8x8xf32>, vector<2x8x8xf32> -> vector<2x8x8xf32>
    "tpu.trace_stop"() : () -> ()
    %58 = vector.extract_strided_slice %13 {offsets = [0, 0, 16], sizes = [2, 8, 8], strides = [1, 1, 1]} : vector<2x8x32xf32> to vector<2x8x8xf32>
    %59 = vector.extract_strided_slice %18 {offsets = [0, 0, 16], sizes = [2, 8, 8], strides = [1, 1, 1]} : vector<2x8x32xf32> to vector<2x8x8xf32>
    %60 = vector.extract_strided_slice %23 {offsets = [0, 0, 16], sizes = [2, 8, 8], strides = [1, 1, 1]} : vector<2x8x32xf32> to vector<2x8x8xf32>
    "tpu.trace_start"() <{level = 10 : i32, message = "bqd,bkd->bqk"}> : () -> ()
    %cst_18 = arith.constant dense<0.000000e+00> : vector<2x8x8xf32>
    %61 = tpu.matmul %58, %59, %cst_18 {dimension_numbers = #tpu.dot_dimension_numbers<[2], [2], [1], [1], [0, 0, 0, 1, 1, 1], [0], [0]>} : vector<2x8x8xf32>, vector<2x8x8xf32>, vector<2x8x8xf32> -> vector<2x8x8xf32>
    "tpu.trace_stop"() : () -> ()
    %cst_19 = arith.constant 0.353553385 : f32
    %62 = vector.broadcast %cst_19 : f32 to vector<2x8x8xf32>
    %63 = arith.mulf %61, %62 : vector<2x8x8xf32>
    %cst_20 = arith.constant dense<0xFF800000> : vector<2x8xf32>
    %64 = vector.multi_reduction <maximumf>, %63, %cst_20 [2] : vector<2x8x8xf32> to vector<2x8xf32>
    %65 = vector.shape_cast %64 : vector<2x8xf32> to vector<2x8x1xf32>
    %66 = vector.broadcast %65 : vector<2x8x1xf32> to vector<2x8x8xf32>
    %67 = arith.subf %63, %66 : vector<2x8x8xf32>
    %68 = math.exp %67 : vector<2x8x8xf32>
    %cst_21 = arith.constant dense<0.000000e+00> : vector<2x8xf32>
    %69 = vector.multi_reduction <add>, %68, %cst_21 [2] : vector<2x8x8xf32> to vector<2x8xf32>
    %70 = vector.shape_cast %69 : vector<2x8xf32> to vector<2x8x1xf32>
    %71 = tpu.reciprocal %70 : vector<2x8x1xf32> -> vector<2x8x1xf32>
    %72 = vector.broadcast %71 : vector<2x8x1xf32> to vector<2x8x8xf32>
    %73 = arith.mulf %68, %72 : vector<2x8x8xf32>
    "tpu.trace_start"() <{level = 10 : i32, message = "bqk,bkd->bqd"}> : () -> ()
    %cst_22 = arith.constant dense<0.000000e+00> : vector<2x8x8xf32>
    %74 = tpu.matmul %73, %60, %cst_22 {dimension_numbers = #tpu.dot_dimension_numbers<[2], [1], [1], [2], [0, 0, 0, 1, 1, 2], [0], [0]>} : vector<2x8x8xf32>, vector<2x8x8xf32>, vector<2x8x8xf32> -> vector<2x8x8xf32>
    "tpu.trace_stop"() : () -> ()
    %75 = vector.extract_strided_slice %13 {offsets = [0, 0, 24], sizes = [2, 8, 8], strides = [1, 1, 1]} : vector<2x8x32xf32> to vector<2x8x8xf32>
    %76 = vector.extract_strided_slice %18 {offsets = [0, 0, 24], sizes = [2, 8, 8], strides = [1, 1, 1]} : vector<2x8x32xf32> to vector<2x8x8xf32>
    %77 = vector.extract_strided_slice %23 {offsets = [0, 0, 24], sizes = [2, 8, 8], strides = [1, 1, 1]} : vector<2x8x32xf32> to vector<2x8x8xf32>
    "tpu.trace_start"() <{level = 10 : i32, message = "bqd,bkd->bqk"}> : () -> ()
    %cst_23 = arith.constant dense<0.000000e+00> : vector<2x8x8xf32>
    %78 = tpu.matmul %75, %76, %cst_23 {dimension_numbers = #tpu.dot_dimension_numbers<[2], [2], [1], [1], [0, 0, 0, 1, 1, 1], [0], [0]>} : vector<2x8x8xf32>, vector<2x8x8xf32>, vector<2x8x8xf32> -> vector<2x8x8xf32>
    "tpu.trace_stop"() : () -> ()
    %cst_24 = arith.constant 0.353553385 : f32
    %79 = vector.broadcast %cst_24 : f32 to vector<2x8x8xf32>
    %80 = arith.mulf %78, %79 : vector<2x8x8xf32>
    %cst_25 = arith.constant dense<0xFF800000> : vector<2x8xf32>
    %81 = vector.multi_reduction <maximumf>, %80, %cst_25 [2] : vector<2x8x8xf32> to vector<2x8xf32>
    %82 = vector.shape_cast %81 : vector<2x8xf32> to vector<2x8x1xf32>
    %83 = vector.broadcast %82 : vector<2x8x1xf32> to vector<2x8x8xf32>
    %84 = arith.subf %80, %83 : vector<2x8x8xf32>
    %85 = math.exp %84 : vector<2x8x8xf32>
    %cst_26 = arith.constant dense<0.000000e+00> : vector<2x8xf32>
    %86 = vector.multi_reduction <add>, %85, %cst_26 [2] : vector<2x8x8xf32> to vector<2x8xf32>
    %87 = vector.shape_cast %86 : vector<2x8xf32> to vector<2x8x1xf32>
    %88 = tpu.reciprocal %87 : vector<2x8x1xf32> -> vector<2x8x1xf32>
    %89 = vector.broadcast %88 : vector<2x8x1xf32> to vector<2x8x8xf32>
    %90 = arith.mulf %85, %89 : vector<2x8x8xf32>
    "tpu.trace_start"() <{level = 10 : i32, message = "bqk,bkd->bqd"}> : () -> ()
    %cst_27 = arith.constant dense<0.000000e+00> : vector<2x8x8xf32>
    %91 = tpu.matmul %90, %77, %cst_27 {dimension_numbers = #tpu.dot_dimension_numbers<[2], [1], [1], [2], [0, 0, 0, 1, 1, 2], [0], [0]>} : vector<2x8x8xf32>, vector<2x8x8xf32>, vector<2x8x8xf32> -> vector<2x8x8xf32>
    "tpu.trace_stop"() : () -> ()
    %92 = tpu.concatenate %40, %57, %74, %91 in 2 : vector<2x8x8xf32>, vector<2x8x8xf32>, vector<2x8x8xf32>, vector<2x8x8xf32> -> vector<2x8x32xf32>
    %93 = vector.shape_cast %92 : vector<2x8x32xf32> to vector<16x32xf32>
    %c0_28 = arith.constant 0 : index
    %c0_29 = arith.constant 0 : index
    %c0_30 = arith.constant 0 : index
    %94 = vector.load %arg3[%c0_28, %c0_29, %c0_30] : memref<1x32x32xf32, #tpu.memory_space<vmem>>, vector<1x32x32xf32>
    %95 = vector.shape_cast %94 : vector<1x32x32xf32> to vector<32x32xf32>
    %cst_31 = arith.constant dense<0.000000e+00> : vector<16x32xf32>
    %96 = tpu.matmul %93, %95, %cst_31 {dimension_numbers = #tpu.dot_dimension_numbers<[1], [0], [0], [1], [0, 0, 1, 1], [], []>} : vector<16x32xf32>, vector<32x32xf32>, vector<16x32xf32> -> vector<16x32xf32>
    %97 = vector.extract_strided_slice %5 {offsets = [3, 0], sizes = [1, 32], strides = [1, 1]} : vector<9x32xf32> to vector<1x32xf32>
    %98 = vector.broadcast %97 : vector<1x32xf32> to vector<16x32xf32>
    %99 = arith.addf %96, %98 : vector<16x32xf32>
    %100 = arith.addf %99, %3 : vector<16x32xf32>
    %101 = vector.extract_strided_slice %5 {offsets = [4, 0], sizes = [1, 32], strides = [1, 1]} : vector<9x32xf32> to vector<1x32xf32>
    %102 = vector.extract_strided_slice %5 {offsets = [5, 0], sizes = [1, 32], strides = [1, 1]} : vector<9x32xf32> to vector<1x32xf32>
    %cst_32 = arith.constant dense<0.000000e+00> : vector<16xf32>
    %103 = vector.multi_reduction <add>, %100, %cst_32 [1] : vector<16x32xf32> to vector<16xf32>
    %104 = vector.shape_cast %103 : vector<16xf32> to vector<16x1xf32>
    %cst_33 = arith.constant 3.200000e+01 : f32
    %105 = vector.broadcast %cst_33 : f32 to vector<16x1xf32>
    %106 = arith.divf %104, %105 : vector<16x1xf32>
    %107 = vector.broadcast %106 : vector<16x1xf32> to vector<16x32xf32>
    %108 = arith.subf %100, %107 : vector<16x32xf32>
    %109 = vector.broadcast %106 : vector<16x1xf32> to vector<16x32xf32>
    %110 = arith.subf %100, %109 : vector<16x32xf32>
    %111 = arith.mulf %108, %110 : vector<16x32xf32>
    %cst_34 = arith.constant dense<0.000000e+00> : vector<16xf32>
    %112 = vector.multi_reduction <add>, %111, %cst_34 [1] : vector<16x32xf32> to vector<16xf32>
    %113 = vector.shape_cast %112 : vector<16xf32> to vector<16x1xf32>
    %cst_35 = arith.constant 3.200000e+01 : f32
    %114 = vector.broadcast %cst_35 : f32 to vector<16x1xf32>
    %115 = arith.divf %113, %114 : vector<16x1xf32>
    %116 = vector.broadcast %106 : vector<16x1xf32> to vector<16x32xf32>
    %117 = arith.subf %100, %116 : vector<16x32xf32>
    %cst_36 = arith.constant 9.99999974E-6 : f32
    %118 = vector.broadcast %cst_36 : f32 to vector<16x1xf32>
    %119 = arith.addf %115, %118 : vector<16x1xf32>
    %120 = math.rsqrt %119 : vector<16x1xf32>
    %121 = vector.broadcast %120 : vector<16x1xf32> to vector<16x32xf32>
    %122 = arith.mulf %117, %121 : vector<16x32xf32>
    %123 = vector.broadcast %101 : vector<1x32xf32> to vector<16x32xf32>
    %124 = arith.mulf %122, %123 : vector<16x32xf32>
    %125 = vector.broadcast %102 : vector<1x32xf32> to vector<16x32xf32>
    %126 = arith.addf %124, %125 : vector<16x32xf32>
    %c0_37 = arith.constant 0 : index
    %c0_38 = arith.constant 0 : index
    %c0_39 = arith.constant 0 : index
    %127 = vector.load %arg4[%c0_37, %c0_38, %c0_39] : memref<1x32x128xf32, #tpu.memory_space<vmem>>, vector<1x32x128xf32>
    %128 = vector.shape_cast %127 : vector<1x32x128xf32> to vector<32x128xf32>
    %cst_40 = arith.constant dense<0.000000e+00> : vector<16x128xf32>
    %129 = tpu.matmul %126, %128, %cst_40 {dimension_numbers = #tpu.dot_dimension_numbers<[1], [0], [0], [1], [0, 0, 1, 1], [], []>} : vector<16x32xf32>, vector<32x128xf32>, vector<16x128xf32> -> vector<16x128xf32>
    %c0_41 = arith.constant 0 : index
    %c0_42 = arith.constant 0 : index
    %c0_43 = arith.constant 0 : index
    %130 = vector.load %arg7[%c0_41, %c0_42, %c0_43] : memref<1x1x128xf32, #tpu.memory_space<vmem>>, vector<1x1x128xf32>
    %131 = vector.shape_cast %130 : vector<1x1x128xf32> to vector<1x128xf32>
    %132 = vector.broadcast %131 : vector<1x128xf32> to vector<16x128xf32>
    %133 = arith.addf %129, %132 : vector<16x128xf32>
    %cst_44 = arith.constant 0.000000e+00 : f32
    %134 = vector.broadcast %cst_44 : f32 to vector<16x128xf32>
    %135 = arith.maximumf %133, %134 : vector<16x128xf32>
    %c0_45 = arith.constant 0 : index
    %c0_46 = arith.constant 0 : index
    %c0_47 = arith.constant 0 : index
    %136 = vector.load %arg5[%c0_45, %c0_46, %c0_47] : memref<1x128x32xf32, #tpu.memory_space<vmem>>, vector<1x128x32xf32>
    %137 = vector.shape_cast %136 : vector<1x128x32xf32> to vector<128x32xf32>
    %cst_48 = arith.constant dense<0.000000e+00> : vector<16x32xf32>
    %138 = tpu.matmul %135, %137, %cst_48 {dimension_numbers = #tpu.dot_dimension_numbers<[1], [0], [0], [1], [0, 0, 1, 1], [], []>} : vector<16x128xf32>, vector<128x32xf32>, vector<16x32xf32> -> vector<16x32xf32>
    %139 = vector.extract_strided_slice %5 {offsets = [6, 0], sizes = [1, 32], strides = [1, 1]} : vector<9x32xf32> to vector<1x32xf32>
    %140 = vector.broadcast %139 : vector<1x32xf32> to vector<16x32xf32>
    %141 = arith.addf %138, %140 : vector<16x32xf32>
    %142 = arith.addf %141, %126 : vector<16x32xf32>
    %143 = vector.extract_strided_slice %5 {offsets = [7, 0], sizes = [1, 32], strides = [1, 1]} : vector<9x32xf32> to vector<1x32xf32>
    %144 = vector.extract_strided_slice %5 {offsets = [8, 0], sizes = [1, 32], strides = [1, 1]} : vector<9x32xf32> to vector<1x32xf32>
    %cst_49 = arith.constant dense<0.000000e+00> : vector<16xf32>
    %145 = vector.multi_reduction <add>, %142, %cst_49 [1] : vector<16x32xf32> to vector<16xf32>
    %146 = vector.shape_cast %145 : vector<16xf32> to vector<16x1xf32>
    %cst_50 = arith.constant 3.200000e+01 : f32
    %147 = vector.broadcast %cst_50 : f32 to vector<16x1xf32>
    %148 = arith.divf %146, %147 : vector<16x1xf32>
    %149 = vector.broadcast %148 : vector<16x1xf32> to vector<16x32xf32>
    %150 = arith.subf %142, %149 : vector<16x32xf32>
    %151 = vector.broadcast %148 : vector<16x1xf32> to vector<16x32xf32>
    %152 = arith.subf %142, %151 : vector<16x32xf32>
    %153 = arith.mulf %150, %152 : vector<16x32xf32>
    %cst_51 = arith.constant dense<0.000000e+00> : vector<16xf32>
    %154 = vector.multi_reduction <add>, %153, %cst_51 [1] : vector<16x32xf32> to vector<16xf32>
    %155 = vector.shape_cast %154 : vector<16xf32> to vector<16x1xf32>
    %cst_52 = arith.constant 3.200000e+01 : f32
    %156 = vector.broadcast %cst_52 : f32 to vector<16x1xf32>
    %157 = arith.divf %155, %156 : vector<16x1xf32>
    %158 = vector.broadcast %148 : vector<16x1xf32> to vector<16x32xf32>
    %159 = arith.subf %142, %158 : vector<16x32xf32>
    %cst_53 = arith.constant 9.99999974E-6 : f32
    %160 = vector.broadcast %cst_53 : f32 to vector<16x1xf32>
    %161 = arith.addf %157, %160 : vector<16x1xf32>
    %162 = math.rsqrt %161 : vector<16x1xf32>
    %163 = vector.broadcast %162 : vector<16x1xf32> to vector<16x32xf32>
    %164 = arith.mulf %159, %163 : vector<16x32xf32>
    %165 = vector.broadcast %143 : vector<1x32xf32> to vector<16x32xf32>
    %166 = arith.mulf %164, %165 : vector<16x32xf32>
    %167 = vector.broadcast %144 : vector<1x32xf32> to vector<16x32xf32>
    %168 = arith.addf %166, %167 : vector<16x32xf32>
    %c0_54 = arith.constant 0 : index
    %c0_55 = arith.constant 0 : index
    %169 = vector.load %arg8[%c0_54, %c0_55] : memref<16x32xf32, #tpu.memory_space<vmem>>, vector<16x32xf32>
    tpu.vector_store %arg8[%c0_54, %c0_55], %168 {strides = array<i32>} : memref<16x32xf32, #tpu.memory_space<vmem>>, vector<16x32xf32>,
    return
  }
  func.func @transform_0(%arg0: i32) -> (i32, i32) {
    %c0_i32 = arith.constant 0 : i32
    %c0_i32_0 = arith.constant 0 : i32
    %c0_i32_1 = arith.constant 0 : i32
    return %c0_i32, %c0_i32_0 : i32, i32
  }
  func.func @transform_1(%arg0: i32) -> (i32, i32, i32) {
    %c0_i32 = arith.constant 0 : i32
    %c0_i32_0 = arith.constant 0 : i32
    %c0_i32_1 = arith.constant 0 : i32
    return %arg0, %c0_i32, %c0_i32_0 : i32, i32, i32
  }
  func.func @transform_2(%arg0: i32) -> (i32, i32, i32) {
    %c0_i32 = arith.constant 0 : i32
    %c0_i32_0 = arith.constant 0 : i32
    %c0_i32_1 = arith.constant 0 : i32
    return %arg0, %c0_i32, %c0_i32_0 : i32, i32, i32
  }
  func.func @transform_3(%arg0: i32) -> (i32, i32, i32) {
    %c0_i32 = arith.constant 0 : i32
    %c0_i32_0 = arith.constant 0 : i32
    %c0_i32_1 = arith.constant 0 : i32
    return %arg0, %c0_i32, %c0_i32_0 : i32, i32, i32
  }
  func.func @transform_4(%arg0: i32) -> (i32, i32, i32) {
    %c0_i32 = arith.constant 0 : i32
    %c0_i32_0 = arith.constant 0 : i32
    %c0_i32_1 = arith.constant 0 : i32
    return %arg0, %c0_i32, %c0_i32_0 : i32, i32, i32
  }
  func.func @transform_5(%arg0: i32) -> (i32, i32, i32) {
    %c0_i32 = arith.constant 0 : i32
    %c0_i32_0 = arith.constant 0 : i32
    %c0_i32_1 = arith.constant 0 : i32
    return %arg0, %c0_i32, %c0_i32_0 : i32, i32, i32
  }
  func.func @transform_6(%arg0: i32) -> (i32, i32, i32) {
    %c0_i32 = arith.constant 0 : i32
    %c0_i32_0 = arith.constant 0 : i32
    %c0_i32_1 = arith.constant 0 : i32
    return %arg0, %c0_i32, %c0_i32_0 : i32, i32, i32
  }
  func.func @transform_7(%arg0: i32) -> (i32, i32) {
    %c0_i32 = arith.constant 0 : i32
    %c0_i32_0 = arith.constant 0 : i32
    %c0_i32_1 = arith.constant 0 : i32
    return %c0_i32, %c0_i32_0 : i32, i32
  }
}

</mosaic_0001>

<llo_original>
// kernel: encoder_forward_pallas.1
$region0: #{encoder_forward_pallas.1}
  #allocation0 [shape = 'u32[]', space=smem, size = 0x4, offset = 0x4, fixed_abs, tag = 'smem constant byte address 0x4 - core index']
  #allocation1 [shape = 'u32[72,128]{1,0:T(1,128)}', space=vmem, size = 0x9000, scoped, tag = 'internal scratch']
  %s0 = inlined_call_operand.vmem [shape: f32[16,32], index: 0, kind: input, shape index: {}]
  %s1 = inlined_call_operand.vmem [shape: f32[2,32,96], index: 1, kind: input, shape index: {}]
  %s2 = inlined_call_operand.vmem [shape: f32[2,32,32], index: 2, kind: input, shape index: {}]
  %s3 = inlined_call_operand.vmem [shape: f32[2,32,128], index: 3, kind: input, shape index: {}]
  %s4 = inlined_call_operand.vmem [shape: f32[2,128,32], index: 4, kind: input, shape index: {}]
  %s5 = inlined_call_operand.vmem [shape: f32[2,9,32], index: 5, kind: input, shape index: {}]
  %s6 = inlined_call_operand.vmem [shape: f32[2,1,128], index: 6, kind: input, shape index: {}]
  %s7 = inlined_call_operand.hbm [shape: f32[16,32], index: 7, kind: output, shape index: {}]
  %s8 = sld [smem:[#allocation0]]
  $region65: #{encoder_forward_pallas.1} parent=0
    _
  %s10 = ssub.s32 1, %s8
  %s11 = scalar_select 0, %s10, %s8
  $region1: #{encoder_forward_pallas.1} parent=0
    #allocation2 [shape = 'u8[8192]{0}', space=vmem, size = 0x2000, scoped, tag = 'output window, operand 0, single buffered']
    #allocation3 [shape = 's32[2]{0}', space=sflag, size = 0x8, scoped, tag = 'scoped memory for encoder_forward_pallas.1']
    %12 = vsyncpa [#allocation3], 0
    loop: start=0, step=1, limit=4
    $region2: #{encoder_forward_pallas.1} parent=1 // loop_pre_header
      _
    $region3: #{encoder_forward_pallas.1} parent=1 // loop_header
      %s14 = sphi 0, %s18
      %p15 = scmp.ge.s32.totalorder %s14, 4
      %s22 = sphi 0, %s22
      %s24 = sphi 0, %s22
      %s25 = sphi 0, %s24
      %s39 = sphi 0, %s25
      %s45 = sphi 0, %s47
      %s48 = sphi 0, %s45
      %s49 = sphi 0, %s48
      %s65 = sphi 0, %s49
      %s71 = sphi 0, %s73
      %s74 = sphi 0, %s71
      %s75 = sphi 0, %s74
      %s91 = sphi 0, %s75
      %s97 = sphi 0, %s99
      %s100 = sphi 0, %s97
      %s101 = sphi 0, %s100
      %s117 = sphi 0, %s101
      %s123 = sphi 0, %s125
      %s126 = sphi 0, %s123
      %s127 = sphi 0, %s126
      %s143 = sphi 0, %s127
      %s149 = sphi 0, %s151
      %s152 = sphi 0, %s149
      %s153 = sphi 0, %s152
      %s169 = sphi 0, %s153
      %s175 = sphi 0, %s177
      %s178 = sphi 0, %s175
      %s179 = sphi 0, %s178
      %s195 = sphi 0, %s179
      %s199 = sphi 0, %s199
      %s201 = sphi 0, %s199
      %s202 = sphi 0, %s201
      %s216 = sphi 0, %s202
    $region4: #{encoder_forward_pallas.1} parent=1 // loop_header_branch
      %17 = sbr.rel (%p15) target = $region8
    $region5: #{encoder_forward_pallas.1} parent=1 // loop_body
      %s19 = ssub.s32 %s14, 1
      %s20 = ssub.s32 %s14, 2
      %s21 = sadd.s32 %s14, 1
      %s23 = sadd.s32 %s22, 1
      %p26 = scmp.eq.s32.totalorder %s14, 1
      %p27 = scmp.ne.s32.totalorder %s22, %s24
      %p28 = scmp.eq.s32.totalorder %s14, 0
      %p29 = por %p27, %p28
      %p30 = scmp.ne.s32.totalorder %s22, %s24
      %p31 = scmp.eq.s32.totalorder %s19, 1
      %p32 = por %p30, %p31
      %p33 = scmp.ne.s32.totalorder %s24, %s25
      %p34 = scmp.eq.s32.totalorder %s19, 0
      %p35 = por %p33, %p34
      %p36 = scmp.ne.s32.totalorder %s24, %s25
      %p37 = scmp.eq.s32.totalorder %s20, 1
      %p38 = por %p36, %p37
      %p40 = scmp.ne.s32.totalorder %s25, %s39
      %p41 = scmp.eq.s32.totalorder %s20, 0
      %p42 = por %p40, %p41
      %s43 = ssub.s32 %s14, %s21
      %p44 = scmp.eq.s32.totalorder %s43, 0
      %s46 = sadd.s32 %s45, 1
      %s47 = scalar_select %p44, %s45, %s46
      %p50 = pneg %p44
      %p51 = scmp.eq.s32.totalorder %s14, 1
      %p52 = por %p50, %p51
      %p53 = scmp.ne.s32.totalorder %s45, %s48
      %p54 = scmp.eq.s32.totalorder %s14, 0
      %p55 = por %p53, %p54
      %p56 = scmp.ne.s32.totalorder %s45, %s48
      %p57 = scmp.eq.s32.totalorder %s19, 1
      %p58 = por %p56, %p57
      %p59 = scmp.ne.s32.totalorder %s48, %s49
      %p60 = scmp.eq.s32.totalorder %s19, 0
      %p61 = por %p59, %p60
      %p62 = scmp.ne.s32.totalorder %s48, %s49
      %p63 = scmp.eq.s32.totalorder %s20, 1
      %p64 = por %p62, %p63
      %p66 = scmp.ne.s32.totalorder %s49, %s65
      %p67 = scmp.eq.s32.totalorder %s20, 0
      %p68 = por %p66, %p67
      %s69 = ssub.s32 %s14, %s21
      %p70 = scmp.eq.s32.totalorder %s69, 0
      %s72 = sadd.s32 %s71, 1
      %s73 = scalar_select %p70, %s71, %s72
      %p76 = pneg %p70
      %p77 = scmp.eq.s32.totalorder %s14, 1
      %p78 = por %p76, %p77
      %p79 = scmp.ne.s32.totalorder %s71, %s74
      %p80 = scmp.eq.s32.totalorder %s14, 0
      %p81 = por %p79, %p80
      %p82 = scmp.ne.s32.totalorder %s71, %s74
      %p83 = scmp.eq.s32.totalorder %s19, 1
      %p84 = por %p82, %p83
      %p85 = scmp.ne.s32.totalorder %s74, %s75
      %p86 = scmp.eq.s32.totalorder %s19, 0
      %p87 = por %p85, %p86
      %p88 = scmp.ne.s32.totalorder %s74, %s75
      %p89 = scmp.eq.s32.totalorder %s20, 1
      %p90 = por %p88, %p89
      %p92 = scmp.ne.s32.totalorder %s75, %s91
      %p93 = scmp.eq.s32.totalorder %s20, 0
      %p94 = por %p92, %p93
      %s95 = ssub.s32 %s14, %s21
      %p96 = scmp.eq.s32.totalorder %s95, 0
      %s98 = sadd.s32 %s97, 1
      %s99 = scalar_select %p96, %s97, %s98
      %p102 = pneg %p96
      %p103 = scmp.eq.s32.totalorder %s14, 1
      %p104 = por %p102, %p103
      %p105 = scmp.ne.s32.totalorder %s97, %s100
      %p106 = scmp.eq.s32.totalorder %s14, 0
      %p107 = por %p105, %p106
      %p108 = scmp.ne.s32.totalorder %s97, %s100
      %p109 = scmp.eq.s32.totalorder %s19, 1
      %p110 = por %p108, %p109
      %p111 = scmp.ne.s32.totalorder %s100, %s101
      %p112 = scmp.eq.s32.totalorder %s19, 0
      %p113 = por %p111, %p112
      %p114 = scmp.ne.s32.totalorder %s100, %s101
      %p115 = scmp.eq.s32.totalorder %s20, 1
      %p116 = por %p114, %p115
      %p118 = scmp.ne.s32.totalorder %s101, %s117
      %p119 = scmp.eq.s32.totalorder %s20, 0
      %p120 = por %p118, %p119
      %s121 = ssub.s32 %s14, %s21
      %p122 = scmp.eq.s32.totalorder %s121, 0
      %s124 = sadd.s32 %s123, 1
      %s125 = scalar_select %p122, %s123, %s124
      %p128 = pneg %p122
      %p129 = scmp.eq.s32.totalorder %s14, 1
      %p130 = por %p128, %p129
      %p131 = scmp.ne.s32.totalorder %s123, %s126
      %p132 = scmp.eq.s32.totalorder %s14, 0
      %p133 = por %p131, %p132
      %p134 = scmp.ne.s32.totalorder %s123, %s126
      %p135 = scmp.eq.s32.totalorder %s19, 1
      %p136 = por %p134, %p135
      %p137 = scmp.ne.s32.totalorder %s126, %s127
      %p138 = scmp.eq.s32.totalorder %s19, 0
      %p139 = por %p137, %p138
      %p140 = scmp.ne.s32.totalorder %s126, %s127
      %p141 = scmp.eq.s32.totalorder %s20, 1
      %p142 = por %p140, %p141
      %p144 = scmp.ne.s32.totalorder %s127, %s143
      %p145 = scmp.eq.s32.totalorder %s20, 0
      %p146 = por %p144, %p145
      %s147 = ssub.s32 %s14, %s21
      %p148 = scmp.eq.s32.totalorder %s147, 0
      %s150 = sadd.s32 %s149, 1
      %s151 = scalar_select %p148, %s149, %s150
      %p154 = pneg %p148
      %p155 = scmp.eq.s32.totalorder %s14, 1
      %p156 = por %p154, %p155
      %p157 = scmp.ne.s32.totalorder %s149, %s152
      %p158 = scmp.eq.s32.totalorder %s14, 0
      %p159 = por %p157, %p158
      %p160 = scmp.ne.s32.totalorder %s149, %s152
      %p161 = scmp.eq.s32.totalorder %s19, 1
      %p162 = por %p160, %p161
      %p163 = scmp.ne.s32.totalorder %s152, %s153
      %p164 = scmp.eq.s32.totalorder %s19, 0
      %p165 = por %p163, %p164
      %p166 = scmp.ne.s32.totalorder %s152, %s153
      %p167 = scmp.eq.s32.totalorder %s20, 1
      %p168 = por %p166, %p167
      %p170 = scmp.ne.s32.totalorder %s153, %s169
      %p171 = scmp.eq.s32.totalorder %s20, 0
      %p172 = por %p170, %p171
      %s173 = ssub.s32 %s14, %s21
      %p174 = scmp.eq.s32.totalorder %s173, 0
      %s176 = sadd.s32 %s175, 1
      %s177 = scalar_select %p174, %s175, %s176
      %p180 = pneg %p174
      %p181 = scmp.eq.s32.totalorder %s14, 1
      %p182 = por %p180, %p181
      %p183 = scmp.ne.s32.totalorder %s175, %s178
      %p184 = scmp.eq.s32.totalorder %s14, 0
      %p185 = por %p183, %p184
      %p186 = scmp.ne.s32.totalorder %s175, %s178
      %p187 = scmp.eq.s32.totalorder %s19, 1
      %p188 = por %p186, %p187
      %p189 = scmp.ne.s32.totalorder %s178, %s179
      %p190 = scmp.eq.s32.totalorder %s19, 0
      %p191 = por %p189, %p190
      %p192 = scmp.ne.s32.totalorder %s178, %s179
      %p193 = scmp.eq.s32.totalorder %s20, 1
      %p194 = por %p192, %p193
      %p196 = scmp.ne.s32.totalorder %s179, %s195
      %p197 = scmp.eq.s32.totalorder %s20, 0
      %p198 = por %p196, %p197
      %s200 = sadd.s32 %s199, 1
      %p203 = scmp.eq.s32.totalorder %s14, 1
      %p204 = scmp.ne.s32.totalorder %s199, %s201
      %p205 = scmp.eq.s32.totalorder %s14, 0
      %p206 = por %p204, %p205
      %p207 = scmp.ne.s32.totalorder %s199, %s201
      %p208 = scmp.eq.s32.totalorder %s19, 1
      %p209 = por %p207, %p208
      %p210 = scmp.ne.s32.totalorder %s201, %s202
      %p211 = scmp.eq.s32.totalorder %s19, 0
      %p212 = por %p210, %p211
      %p213 = scmp.ne.s32.totalorder %s201, %s202
      %p214 = scmp.eq.s32.totalorder %s20, 1
      %p215 = por %p213, %p214
      %p217 = scmp.ne.s32.totalorder %s202, %s216
      %p218 = scmp.eq.s32.totalorder %s20, 0
      %p219 = por %p217, %p218
      %p220 = scmp.le.s32.totalorder 1, %s14
      %p221 = scmp.lt.s32.totalorder %s14, 3
      %p222 = pnand %p220, %p221
      %p223 = pneg %p222
      // Predicated region
      $region9: #{encoder_forward_pallas.1} parent=5 // pred_check
        _
      $region10: #{encoder_forward_pallas.1} parent=5 // pred_check_branch
        %225 = sbr.rel (%p222) target = $region12
      $region11: #{encoder_forward_pallas.1} parent=5 // pred_region
        %s226 = ssub.s32 %s14, 1
        // Predicated region
        $region13: #{encoder_forward_pallas.1} parent=11 // pred_check
          %p227 = pneg %p35
        $region14: #{encoder_forward_pallas.1} parent=11 // pred_check_branch
          %229 = sbr.rel (%p227) target = $region16
        $region15: #{encoder_forward_pallas.1} parent=11 // pred_region
          _
        $region16: #{encoder_forward_pallas.1} parent=11 // pred_fallthru
          _
      $region12: #{encoder_forward_pallas.1} parent=5 // pred_fallthru
        _
      %p230 = scmp.lt.s32.totalorder %s14, 2
      // Predicated region
      $region17: #{encoder_forward_pallas.1} parent=5 // pred_check
        %p231 = pneg %p230
      $region18: #{encoder_forward_pallas.1} parent=5 // pred_check_branch
        %233 = sbr.rel (%p231) target = $region20
      $region19: #{encoder_forward_pallas.1} parent=5 // pred_region
        // Predicated region
        $region21: #{encoder_forward_pallas.1} parent=19 // pred_check
          %p234 = pneg %p55
        $region22: #{encoder_forward_pallas.1} parent=19 // pred_check_branch
          %236 = sbr.rel (%p234) target = $region24
        $region23: #{encoder_forward_pallas.1} parent=19 // pred_region
          %p237 = scmp.lt.s32.totalorder %s14, 1
          %s238 = scalar_select %p237, %s14, 1
          %s239 = smul.addr %s238, 4
          %s240 = smul.addr %s239, 8
          %s241 = scalar_lea.vmem %s1, %s240
        $region24: #{encoder_forward_pallas.1} parent=19 // pred_fallthru
          _
        // Predicated region
        $region25: #{encoder_forward_pallas.1} parent=19 // pred_check
          %p242 = pneg %p81
        $region26: #{encoder_forward_pallas.1} parent=19 // pred_check_branch
          %244 = sbr.rel (%p242) target = $region28
        $region27: #{encoder_forward_pallas.1} parent=19 // pred_region
          %p245 = scmp.lt.s32.totalorder %s14, 1
          %s246 = scalar_select %p245, %s14, 1
          %s247 = smul.addr %s246, 4
          %s248 = smul.addr %s247, 8
          %s249 = scalar_lea.vmem %s2, %s248
        $region28: #{encoder_forward_pallas.1} parent=19 // pred_fallthru
          _
        // Predicated region
        $region29: #{encoder_forward_pallas.1} parent=19 // pred_check
          %p250 = pneg %p107
        $region30: #{encoder_forward_pallas.1} parent=19 // pred_check_branch
          %252 = sbr.rel (%p250) target = $region32
        $region31: #{encoder_forward_pallas.1} parent=19 // pred_region
          %p253 = scmp.lt.s32.totalorder %s14, 1
          %s254 = scalar_select %p253, %s14, 1
          %s255 = smul.addr %s254, 4
          %s256 = smul.addr %s255, 8
          %s257 = scalar_lea.vmem %s3, %s256
        $region32: #{encoder_forward_pallas.1} parent=19 // pred_fallthru
          _
        // Predicated region
        $region33: #{encoder_forward_pallas.1} parent=19 // pred_check
          %p258 = pneg %p133
        $region34: #{encoder_forward_pallas.1} parent=19 // pred_check_branch
          %260 = sbr.rel (%p258) target = $region36
        $region35: #{encoder_forward_pallas.1} parent=19 // pred_region
          %p261 = scmp.lt.s32.totalorder %s14, 1
          %s262 = scalar_select %p261, %s14, 1
          %s263 = smul.addr %s262, 16
          %s264 = smul.addr %s263, 8
          %s265 = scalar_lea.vmem %s4, %s264
        $region36: #{encoder_forward_pallas.1} parent=19 // pred_fallthru
          _
        // Predicated region
        $region37: #{encoder_forward_pallas.1} parent=19 // pred_check
          %p266 = pneg %p159
        $region38: #{encoder_forward_pallas.1} parent=19 // pred_check_branch
          %268 = sbr.rel (%p266) target = $region40
        $region39: #{encoder_forward_pallas.1} parent=19 // pred_region
          %p269 = scmp.lt.s32.totalorder %s14, 1
          %s270 = scalar_select %p269, %s14, 1
          %s271 = smul.addr %s270, 2
          %s272 = smul.addr %s271, 8
          %s273 = scalar_lea.vmem %s5, %s272
        $region40: #{encoder_forward_pallas.1} parent=19 // pred_fallthru
          _
        // Predicated region
        $region41: #{encoder_forward_pallas.1} parent=19 // pred_check
          %p274 = pneg %p185
        $region42: #{encoder_forward_pallas.1} parent=19 // pred_check_branch
          %276 = sbr.rel (%p274) target = $region44
        $region43: #{encoder_forward_pallas.1} parent=19 // pred_region
          %p277 = scmp.lt.s32.totalorder %s14, 1
          %s278 = scalar_select %p277, %s14, 1
          %s279 = scalar_lea.vmem %s6, %s278
        $region44: #{encoder_forward_pallas.1} parent=19 // pred_fallthru
          _
      $region20: #{encoder_forward_pallas.1} parent=5 // pred_fallthru
        _
      %p280 = scmp.le.s32.totalorder 1, %s14
      %p281 = scmp.lt.s32.totalorder %s14, 3
      %p282 = pnand %p280, %p281
      %p283 = pneg %p282
      // Predicated region
      $region45: #{encoder_forward_pallas.1} parent=5 // pred_check
        _
      $region46: #{encoder_forward_pallas.1} parent=5 // pred_check_branch
        %285 = sbr.rel (%p282) target = $region48
      $region47: #{encoder_forward_pallas.1} parent=5 // pred_region
        %s286 = ssub.s32 %s14, 1
        %p287 = pneg %p35
        %p288 = pneg %p32
        %p289 = scmp.lt.s32.totalorder %s19, 1
        %s290 = scalar_select %p289, %s19, 1
        %s291 = smul.addr %s290, 4
        %s292 = smul.addr %s291, 8
        %s293 = scalar_lea.vmem %s1, %s292
        %p294 = pneg %p61
        %p295 = pneg %p58
        %p296 = scmp.lt.s32.totalorder %s19, 1
        %s297 = scalar_select %p296, %s19, 1
        %s298 = smul.addr %s297, 4
        %s299 = smul.addr %s298, 8
        %s300 = scalar_lea.vmem %s2, %s299
        %p301 = pneg %p87
        %p302 = pneg %p84
        %p303 = scmp.lt.s32.totalorder %s19, 1
        %s304 = scalar_select %p303, %s19, 1
        %s305 = smul.addr %s304, 4
        %s306 = smul.addr %s305, 8
        %s307 = scalar_lea.vmem %s3, %s306
        %p308 = pneg %p113
        %p309 = pneg %p110
        %p310 = scmp.lt.s32.totalorder %s19, 1
        %s311 = scalar_select %p310, %s19, 1
        %s312 = smul.addr %s311, 16
        %s313 = smul.addr %s312, 8
        %s314 = scalar_lea.vmem %s4, %s313
        %p315 = pneg %p139
        %p316 = pneg %p136
        %p317 = scmp.lt.s32.totalorder %s19, 1
        %s318 = scalar_select %p317, %s19, 1
        %s319 = smul.addr %s318, 2
        %s320 = smul.addr %s319, 8
        %s321 = scalar_lea.vmem %s5, %s320
        %p322 = pneg %p165
        %p323 = pneg %p162
        %p324 = scmp.lt.s32.totalorder %s19, 1
        %s325 = scalar_select %p324, %s19, 1
        %s326 = scalar_lea.vmem %s6, %s325
        %p327 = pneg %p191
        %p328 = pneg %p188
        %p329 = pneg %p212
        %p330 = pneg %p209
        %p331 = scmp.lt.s32.totalorder %s19, 1
        %s332 = scalar_select %p331, %s19, 1
        %s333 = smul.addr %s332, 4
        %s334 = smul.addr %s333, 8
        %s335 = scalar_lea.vmem %s1, %s334
        %p336 = scmp.lt.s32.totalorder %s19, 1
        %s337 = scalar_select %p336, %s19, 1
        %s338 = smul.addr %s337, 4
        %s339 = smul.addr %s338, 8
        %s340 = scalar_lea.vmem %s2, %s339
        %p341 = scmp.lt.s32.totalorder %s19, 1
        %s342 = scalar_select %p341, %s19, 1
        %s343 = smul.addr %s342, 4
        %s344 = smul.addr %s343, 8
        %s345 = scalar_lea.vmem %s3, %s344
        %p346 = scmp.lt.s32.totalorder %s19, 1
        %s347 = scalar_select %p346, %s19, 1
        %s348 = smul.addr %s347, 16
        %s349 = smul.addr %s348, 8
        %s350 = scalar_lea.vmem %s4, %s349
        %p351 = scmp.lt.s32.totalorder %s19, 1
        %s352 = scalar_select %p351, %s19, 1
        %s353 = smul.addr %s352, 2
        %s354 = smul.addr %s353, 8
        %s355 = scalar_lea.vmem %s5, %s354
        %p356 = scmp.lt.s32.totalorder %s19, 1
        %s357 = scalar_select %p356, %s19, 1
        %s358 = scalar_lea.vmem %s6, %s357
        %p359 = scmp.eq.s32.totalorder %s19, 0
        // Predicated region
        $region49: #{encoder_forward_pallas.1} parent=47 // pred_check
          %p360 = pneg %p359
        $region50: #{encoder_forward_pallas.1} parent=47 // pred_check_branch
          %362 = sbr.rel (%p360) target = $region52
        $region51: #{encoder_forward_pallas.1} parent=47 // pred_region
          %v363 = vld [vmem:[%s0] sm:$0xff]
          %v364 = vld [vmem:[%s0 + $0x8] sm:$0xff]
          %vm365 = vcmask 261120
          %366 = vst.msk [vmem:[#allocation2] sm:$0xff] %vm365, %v363
          %367 = vst.msk [vmem:[#allocation2 + $0x8] sm:$0xff] %vm365, %v364
        $region52: #{encoder_forward_pallas.1} parent=47 // pred_fallthru
          _
        %v368 = vld [vmem:[#allocation2] sm:$0xff]
        %v369 = vld [vmem:[#allocation2 + $0x8] sm:$0xff]
        %v370 = vld [vmem:[%s355] sm:$0xff]
        %v371 = vld [vmem:[%s355 + $0x8] sm:$0x1]
        %v372 = vld [vmem:[%s335] sm:$0xff]
        %v373 = vld [vmem:[%s335 + $0x8] sm:$0xff]
        %v374 = vld [vmem:[%s335 + $0x10] sm:$0xff]
        %v375 = vld [vmem:[%s335 + $0x18] sm:$0xff]
        %vm376 = vcmask 261120
        %v378 = vsel %vm376, %v368, 0
        %v381 = vsel %vm376, %v369, 0
        %383 = vmatpush.msra.mxu0 0.0
        %384 = vmatpush.msra.mxu0 0.0
        %385 = vmatpush.msra.mxu0 0.0
        %386 = vmatpush.msra.mxu0 0.0
        %387 = vmatpush.msra.mxu0 0.0
        %388 = vmatpush.msra.mxu0 0.0
        %389 = vmatpush.msra.mxu0 0.0
        %390 = vmatpush.msra.mxu0 0.0
        %391 = vmatpush.msra.mxu0 0.0
        %392 = vmatpush.msra.mxu0 0.0
        %393 = vmatpush.msra.mxu0 0.0
        %394 = vmatpush.msra.mxu0 0.0
        %395 = vmatpush.msra.mxu0 %v375
        %396 = vmatpush.msra.mxu0 %v374
        %397 = vmatpush.msra.mxu0 %v373
        %398 = vmatpush.msra.mxu0 %v372
        %399 = vmatmul.f32.gmra.mxu0 %v378
        %v400 = vpop.f32.mrf.mxu0
        %v401 = vadd.f32 0.0, %v400
        %402 = vmatmul.f32.gmra.mxu0 %v381
        %v403 = vpop.f32.mrf.mxu0
        %v404 = vadd.f32 0.0, %v403
        %405 = vdwg.mxu0
        %v406 = vperm.slane %v370, 0
        %v407 = vadd.f32 %v401, %v406
        %v408 = vadd.f32 %v404, %v406
        %v409 = vperm.slane %v370, 1
        %411 = vrot.lane.b32.xlu0 %v409, 32
        %v412 = vpop.permute.xlu0 %411
        %v414 = vadd.f32 %v401, %v412
        %v415 = vadd.f32 %v404, %v412
        %v416 = vperm.slane %v370, 2
        %418 = vrot.lane.b32.xlu0 %v416, 64
        %v419 = vpop.permute.xlu0 %418
        %v421 = vadd.f32 %v401, %v419
        %v422 = vadd.f32 %v404, %v419
        %424 = vrot.lane.b32.xlu0 %v414, 96
        %v425 = vpop.permute.xlu0 %424
        %vm426 = vcmask 64512
        %v428 = vsel %vm426, %v407, 0
        %v430 = vsel %vm426, %v425, 0
        %432 = vmatpush.xpose.msra.mxu0 0.0
        %433 = vmatpush.xpose.msra.mxu0 0.0
        %434 = vmatpush.xpose.msra.mxu0 0.0
        %435 = vmatpush.xpose.msra.mxu0 0.0
        %436 = vmatpush.xpose.msra.mxu0 0.0
        %437 = vmatpush.xpose.msra.mxu0 0.0
        %438 = vmatpush.xpose.msra.mxu0 0.0
        %439 = vmatpush.xpose.msra.mxu0 0.0
        %440 = vmatpush.xpose.msra.mxu0 0.0
        %441 = vmatpush.xpose.msra.mxu0 0.0
        %442 = vmatpush.xpose.msra.mxu0 0.0
        %443 = vmatpush.xpose.msra.mxu0 0.0
        %444 = vmatpush.xpose.msra.mxu0 0.0
        %445 = vmatpush.xpose.msra.mxu0 0.0
        %446 = vmatpush.xpose.msra.mxu0 0.0
        %447 = vmatpush.xpose.msra.mxu0 %v430
        %448 = vmatmul.f32.gmra.mxu0 %v428
        %v449 = vpop.f32.mrf.mxu0
        %v450 = vadd.f32 0.0, %v449
        %451 = vdwg.mxu0
        %453 = vrot.lane.b32.xlu0 %v415, 96
        %v454 = vpop.permute.xlu0 %453
        %v456 = vsel %vm426, %v408, 0
        %v458 = vsel %vm426, %v454, 0
        %460 = vmatpush.xpose.msra.mxu0 0.0
        %461 = vmatpush.xpose.msra.mxu0 0.0
        %462 = vmatpush.xpose.msra.mxu0 0.0
        %463 = vmatpush.xpose.msra.mxu0 0.0
        %464 = vmatpush.xpose.msra.mxu0 0.0
        %465 = vmatpush.xpose.msra.mxu0 0.0
        %466 = vmatpush.xpose.msra.mxu0 0.0
        %467 = vmatpush.xpose.msra.mxu0 0.0
        %468 = vmatpush.xpose.msra.mxu0 0.0
        %469 = vmatpush.xpose.msra.mxu0 0.0
        %470 = vmatpush.xpose.msra.mxu0 0.0
        %471 = vmatpush.xpose.msra.mxu0 0.0
        %472 = vmatpush.xpose.msra.mxu0 0.0
        %473 = vmatpush.xpose.msra.mxu0 0.0
        %474 = vmatpush.xpose.msra.mxu0 0.0
        %475 = vmatpush.xpose.msra.mxu0 %v458
        %476 = vmatmul.f32.gmra.mxu0 %v456
        %v477 = vpop.f32.mrf.mxu0
        %v478 = vadd.f32 0.0, %v477
        %479 = vdwg.mxu0
        %v480 = vmul.f32 %v450, 0.35355338
        %v481 = vmul.f32 %v478, 0.35355338
        %v482 = vsel %vm426, %v480, -inf
        %483 = vmax.xlane.f32.xlu0 %v482
        %v484 = vpop.xlane.xlu0 %483
        %v485 = vsel %vm426, %v481, -inf
        %486 = vmax.xlane.f32.xlu0 %v485
        %v487 = vpop.xlane.xlu0 %486
        %v488 = vsub.f32 %v480, %v484
        %v489 = vsub.f32 %v481, %v487
        %v490 = vmul.f32 %v488, 1.442695
        %v491 = vpow.pop %v490
        %v492 = vmul.f32 %v489, 1.442695
        %v493 = vpow.pop %v492
        %v494 = vsel %vm426, %v491, 0.0
        %495 = vadd.xlane.f32.xlu0 %v494
        %v496 = vpop.xlane.xlu0 %495
        %v497 = vsel %vm426, %v493, 0.0
        %498 = vadd.xlane.f32.xlu0 %v497
        %v499 = vpop.xlane.xlu0 %498
        %v500 = vrcp.pop %v496
        %v501 = vmul.f32 %v496, %v500
        %v502 = vsub.f32 1.0, %v501
        %v503 = vmul.f32 %v500, %v502
        %v504 = vadd.f32 %v500, %v503
        %vm505 = vweird.f32 %v496
        %vm506 = vweird.f32 %v500
        %vm507 = vmor %vm505, %vm506
        %v508 = vsel %vm507, %v500, %v504
        %v509 = vand.u32 2147483647, %v496
        %vm510 = vcmp.eq.f32.partialorder %v509, 8.507059e+37
        %v511 = vand.u32 %v496, 2147483648
        %v512 = vor.u32 1.1754944e-38, %v511
        %v513 = vsel %vm510, %v512, %v508
        %v514 = vrcp.pop %v499
        %v515 = vmul.f32 %v499, %v514
        %v516 = vsub.f32 1.0, %v515
        %v517 = vmul.f32 %v514, %v516
        %v518 = vadd.f32 %v514, %v517
        %vm519 = vweird.f32 %v499
        %vm520 = vweird.f32 %v514
        %vm521 = vmor %vm519, %vm520
        %v522 = vsel %vm521, %v514, %v518
        %v523 = vand.u32 2147483647, %v499
        %vm524 = vcmp.eq.f32.partialorder %v523, 8.507059e+37
        %v525 = vand.u32 %v499, 2147483648
        %v526 = vor.u32 1.1754944e-38, %v525
        %v527 = vsel %vm524, %v526, %v522
        %v528 = vmul.f32 %v491, %v513
        %v529 = vmul.f32 %v493, %v527
        %531 = vrot.lane.b32.xlu0 %v421, 64
        %v532 = vpop.permute.xlu0 %531
        %v535 = vsel %vm426, %v528, 0
        %537 = vmatpush.msra.mxu0 0.0
        %538 = vmatpush.msra.mxu0 0.0
        %539 = vmatpush.msra.mxu0 0.0
        %540 = vmatpush.msra.mxu0 0.0
        %541 = vmatpush.msra.mxu0 0.0
        %542 = vmatpush.msra.mxu0 0.0
        %543 = vmatpush.msra.mxu0 0.0
        %544 = vmatpush.msra.mxu0 0.0
        %545 = vmatpush.msra.mxu0 0.0
        %546 = vmatpush.msra.mxu0 0.0
        %547 = vmatpush.msra.mxu0 0.0
        %548 = vmatpush.msra.mxu0 0.0
        %549 = vmatpush.msra.mxu0 0.0
        %550 = vmatpush.msra.mxu0 0.0
        %551 = vmatpush.msra.mxu0 0.0
        %552 = vmatpush.msra.mxu0 %v532
        %553 = vmatmul.f32.gmra.mxu0 %v535
        %v554 = vpop.f32.mrf.mxu0
        %v555 = vadd.f32 0.0, %v554
        %556 = vdwg.mxu0
        %558 = vrot.lane.b32.xlu0 %v422, 64
        %v559 = vpop.permute.xlu0 %558
        %v562 = vsel %vm426, %v529, 0
        %564 = vmatpush.msra.mxu0 0.0
        %565 = vmatpush.msra.mxu0 0.0
        %566 = vmatpush.msra.mxu0 0.0
        %567 = vmatpush.msra.mxu0 0.0
        %568 = vmatpush.msra.mxu0 0.0
        %569 = vmatpush.msra.mxu0 0.0
        %570 = vmatpush.msra.mxu0 0.0
        %571 = vmatpush.msra.mxu0 0.0
        %572 = vmatpush.msra.mxu0 0.0
        %573 = vmatpush.msra.mxu0 0.0
        %574 = vmatpush.msra.mxu0 0.0
        %575 = vmatpush.msra.mxu0 0.0
        %576 = vmatpush.msra.mxu0 0.0
        %577 = vmatpush.msra.mxu0 0.0
        %578 = vmatpush.msra.mxu0 0.0
        %579 = vmatpush.msra.mxu0 %v559
        %580 = vmatmul.f32.gmra.mxu0 %v562
        %v581 = vpop.f32.mrf.mxu0
        %v582 = vadd.f32 0.0, %v581
        %583 = vdwg.mxu0
        %584 = vrot.lane.b32.xlu0 %v407, 120
        %v585 = vpop.permute.xlu0 %584
        %586 = vrot.lane.b32.xlu0 %v414, 88
        %v587 = vpop.permute.xlu0 %586
        %v588 = vsel %vm426, %v585, 0
        %v590 = vsel %vm426, %v587, 0
        %592 = vmatpush.xpose.msra.mxu0 0.0
        %593 = vmatpush.xpose.msra.mxu0 0.0
        %594 = vmatpush.xpose.msra.mxu0 0.0
        %595 = vmatpush.xpose.msra.mxu0 0.0
        %596 = vmatpush.xpose.msra.mxu0 0.0
        %597 = vmatpush.xpose.msra.mxu0 0.0
        %598 = vmatpush.xpose.msra.mxu0 0.0
        %599 = vmatpush.xpose.msra.mxu0 0.0
        %600 = vmatpush.xpose.msra.mxu0 0.0
        %601 = vmatpush.xpose.msra.mxu0 0.0
        %602 = vmatpush.xpose.msra.mxu0 0.0
        %603 = vmatpush.xpose.msra.mxu0 0.0
        %604 = vmatpush.xpose.msra.mxu0 0.0
        %605 = vmatpush.xpose.msra.mxu0 0.0
        %606 = vmatpush.xpose.msra.mxu0 0.0
        %607 = vmatpush.xpose.msra.mxu0 %v590
        %608 = vmatmul.f32.gmra.mxu0 %v588
        %v609 = vpop.f32.mrf.mxu0
        %v610 = vadd.f32 0.0, %v609
        %611 = vdwg.mxu0
        %612 = vrot.lane.b32.xlu0 %v408, 120
        %v613 = vpop.permute.xlu0 %612
        %614 = vrot.lane.b32.xlu0 %v415, 88
        %v615 = vpop.permute.xlu0 %614
        %v616 = vsel %vm426, %v613, 0
        %v618 = vsel %vm426, %v615, 0
        %620 = vmatpush.xpose.msra.mxu0 0.0
        %621 = vmatpush.xpose.msra.mxu0 0.0
        %622 = vmatpush.xpose.msra.mxu0 0.0
        %623 = vmatpush.xpose.msra.mxu0 0.0
        %624 = vmatpush.xpose.msra.mxu0 0.0
        %625 = vmatpush.xpose.msra.mxu0 0.0
        %626 = vmatpush.xpose.msra.mxu0 0.0
        %627 = vmatpush.xpose.msra.mxu0 0.0
        %628 = vmatpush.xpose.msra.mxu0 0.0
        %629 = vmatpush.xpose.msra.mxu0 0.0
        %630 = vmatpush.xpose.msra.mxu0 0.0
        %631 = vmatpush.xpose.msra.mxu0 0.0
        %632 = vmatpush.xpose.msra.mxu0 0.0
        %633 = vmatpush.xpose.msra.mxu0 0.0
        %634 = vmatpush.xpose.msra.mxu0 0.0
        %635 = vmatpush.xpose.msra.mxu0 %v618
        %636 = vmatmul.f32.gmra.mxu0 %v616
        %v637 = vpop.f32.mrf.mxu0
        %v638 = vadd.f32 0.0, %v637
        %639 = vdwg.mxu0
        %v640 = vmul.f32 %v610, 0.35355338
        %v641 = vmul.f32 %v638, 0.35355338
        %v642 = vsel %vm426, %v640, -inf
        %643 = vmax.xlane.f32.xlu0 %v642
        %v644 = vpop.xlane.xlu0 %643
        %v645 = vsel %vm426, %v641, -inf
        %646 = vmax.xlane.f32.xlu0 %v645
        %v647 = vpop.xlane.xlu0 %646
        %v648 = vsub.f32 %v640, %v644
        %v649 = vsub.f32 %v641, %v647
        %v650 = vmul.f32 %v648, 1.442695
        %v651 = vpow.pop %v650
        %v652 = vmul.f32 %v649, 1.442695
        %v653 = vpow.pop %v652
        %v654 = vsel %vm426, %v651, 0.0
        %655 = vadd.xlane.f32.xlu0 %v654
        %v656 = vpop.xlane.xlu0 %655
        %v657 = vsel %vm426, %v653, 0.0
        %658 = vadd.xlane.f32.xlu0 %v657
        %v659 = vpop.xlane.xlu0 %658
        %v660 = vrcp.pop %v656
        %v661 = vmul.f32 %v656, %v660
        %v662 = vsub.f32 1.0, %v661
        %v663 = vmul.f32 %v660, %v662
        %v664 = vadd.f32 %v660, %v663
        %vm665 = vweird.f32 %v656
        %vm666 = vweird.f32 %v660
        %vm667 = vmor %vm665, %vm666
        %v668 = vsel %vm667, %v660, %v664
        %v669 = vand.u32 2147483647, %v656
        %vm670 = vcmp.eq.f32.partialorder %v669, 8.507059e+37
        %v671 = vand.u32 %v656, 2147483648
        %v672 = vor.u32 1.1754944e-38, %v671
        %v673 = vsel %vm670, %v672, %v668
        %v674 = vrcp.pop %v659
        %v675 = vmul.f32 %v659, %v674
        %v676 = vsub.f32 1.0, %v675
        %v677 = vmul.f32 %v674, %v676
        %v678 = vadd.f32 %v674, %v677
        %vm679 = vweird.f32 %v659
        %vm680 = vweird.f32 %v674
        %vm681 = vmor %vm679, %vm680
        %v682 = vsel %vm681, %v674, %v678
        %v683 = vand.u32 2147483647, %v659
        %vm684 = vcmp.eq.f32.partialorder %v683, 8.507059e+37
        %v685 = vand.u32 %v659, 2147483648
        %v686 = vor.u32 1.1754944e-38, %v685
        %v687 = vsel %vm684, %v686, %v682
        %v688 = vmul.f32 %v651, %v673
        %v689 = vmul.f32 %v653, %v687
        %690 = vrot.lane.b32.xlu0 %v421, 56
        %v691 = vpop.permute.xlu0 %690
        %v694 = vsel %vm426, %v688, 0
        %696 = vmatpush.msra.mxu0 0.0
        %697 = vmatpush.msra.mxu0 0.0
        %698 = vmatpush.msra.mxu0 0.0
        %699 = vmatpush.msra.mxu0 0.0
        %700 = vmatpush.msra.mxu0 0.0
        %701 = vmatpush.msra.mxu0 0.0
        %702 = vmatpush.msra.mxu0 0.0
        %703 = vmatpush.msra.mxu0 0.0
        %704 = vmatpush.msra.mxu0 0.0
        %705 = vmatpush.msra.mxu0 0.0
        %706 = vmatpush.msra.mxu0 0.0
        %707 = vmatpush.msra.mxu0 0.0
        %708 = vmatpush.msra.mxu0 0.0
        %709 = vmatpush.msra.mxu0 0.0
        %710 = vmatpush.msra.mxu0 0.0
        %711 = vmatpush.msra.mxu0 %v691
        %712 = vmatmul.f32.gmra.mxu0 %v694
        %v713 = vpop.f32.mrf.mxu0
        %v714 = vadd.f32 0.0, %v713
        %715 = vdwg.mxu0
        %716 = vrot.lane.b32.xlu0 %v422, 56
        %v717 = vpop.permute.xlu0 %716
        %v720 = vsel %vm426, %v689, 0
        %722 = vmatpush.msra.mxu0 0.0
        %723 = vmatpush.msra.mxu0 0.0
        %724 = vmatpush.msra.mxu0 0.0
        %725 = vmatpush.msra.mxu0 0.0
        %726 = vmatpush.msra.mxu0 0.0
        %727 = vmatpush.msra.mxu0 0.0
        %728 = vmatpush.msra.mxu0 0.0
        %729 = vmatpush.msra.mxu0 0.0
        %730 = vmatpush.msra.mxu0 0.0
        %731 = vmatpush.msra.mxu0 0.0
        %732 = vmatpush.msra.mxu0 0.0
        %733 = vmatpush.msra.mxu0 0.0
        %734 = vmatpush.msra.mxu0 0.0
        %735 = vmatpush.msra.mxu0 0.0
        %736 = vmatpush.msra.mxu0 0.0
        %737 = vmatpush.msra.mxu0 %v717
        %738 = vmatmul.f32.gmra.mxu0 %v720
        %v739 = vpop.f32.mrf.mxu0
        %v740 = vadd.f32 0.0, %v739
        %741 = vdwg.mxu0
        %742 = vrot.lane.b32.xlu0 %v407, 112
        %v743 = vpop.permute.xlu0 %742
        %744 = vrot.lane.b32.xlu0 %v414, 80
        %v745 = vpop.permute.xlu0 %744
        %v746 = vsel %vm426, %v743, 0
        %v748 = vsel %vm426, %v745, 0
        %750 = vmatpush.xpose.msra.mxu0 0.0
        %751 = vmatpush.xpose.msra.mxu0 0.0
        %752 = vmatpush.xpose.msra.mxu0 0.0
        %753 = vmatpush.xpose.msra.mxu0 0.0
        %754 = vmatpush.xpose.msra.mxu0 0.0
        %755 = vmatpush.xpose.msra.mxu0 0.0
        %756 = vmatpush.xpose.msra.mxu0 0.0
        %757 = vmatpush.xpose.msra.mxu0 0.0
        %758 = vmatpush.xpose.msra.mxu0 0.0
        %759 = vmatpush.xpose.msra.mxu0 0.0
        %760 = vmatpush.xpose.msra.mxu0 0.0
        %761 = vmatpush.xpose.msra.mxu0 0.0
        %762 = vmatpush.xpose.msra.mxu0 0.0
        %763 = vmatpush.xpose.msra.mxu0 0.0
        %764 = vmatpush.xpose.msra.mxu0 0.0
        %765 = vmatpush.xpose.msra.mxu0 %v748
        %766 = vmatmul.f32.gmra.mxu0 %v746
        %v767 = vpop.f32.mrf.mxu0
        %v768 = vadd.f32 0.0, %v767
        %769 = vdwg.mxu0
        %770 = vrot.lane.b32.xlu0 %v408, 112
        %v771 = vpop.permute.xlu0 %770
        %772 = vrot.lane.b32.xlu0 %v415, 80
        %v773 = vpop.permute.xlu0 %772
        %v774 = vsel %vm426, %v771, 0
        %v776 = vsel %vm426, %v773, 0
        %778 = vmatpush.xpose.msra.mxu0 0.0
        %779 = vmatpush.xpose.msra.mxu0 0.0
        %780 = vmatpush.xpose.msra.mxu0 0.0
        %781 = vmatpush.xpose.msra.mxu0 0.0
        %782 = vmatpush.xpose.msra.mxu0 0.0
        %783 = vmatpush.xpose.msra.mxu0 0.0
        %784 = vmatpush.xpose.msra.mxu0 0.0
        %785 = vmatpush.xpose.msra.mxu0 0.0
        %786 = vmatpush.xpose.msra.mxu0 0.0
        %787 = vmatpush.xpose.msra.mxu0 0.0
        %788 = vmatpush.xpose.msra.mxu0 0.0
        %789 = vmatpush.xpose.msra.mxu0 0.0
        %790 = vmatpush.xpose.msra.mxu0 0.0
        %791 = vmatpush.xpose.msra.mxu0 0.0
        %792 = vmatpush.xpose.msra.mxu0 0.0
        %793 = vmatpush.xpose.msra.mxu0 %v776
        %794 = vmatmul.f32.gmra.mxu0 %v774
        %v795 = vpop.f32.mrf.mxu0
        %v796 = vadd.f32 0.0, %v795
        %797 = vdwg.mxu0
        %v798 = vmul.f32 %v768, 0.35355338
        %v799 = vmul.f32 %v796, 0.35355338
        %v800 = vsel %vm426, %v798, -inf
        %801 = vmax.xlane.f32.xlu0 %v800
        %v802 = vpop.xlane.xlu0 %801
        %v803 = vsel %vm426, %v799, -inf
        %804 = vmax.xlane.f32.xlu0 %v803
        %v805 = vpop.xlane.xlu0 %804
        %v806 = vsub.f32 %v798, %v802
        %v807 = vsub.f32 %v799, %v805
        %v808 = vmul.f32 %v806, 1.442695
        %v809 = vpow.pop %v808
        %v810 = vmul.f32 %v807, 1.442695
        %v811 = vpow.pop %v810
        %v812 = vsel %vm426, %v809, 0.0
        %813 = vadd.xlane.f32.xlu0 %v812
        %v814 = vpop.xlane.xlu0 %813
        %v815 = vsel %vm426, %v811, 0.0
        %816 = vadd.xlane.f32.xlu0 %v815
        %v817 = vpop.xlane.xlu0 %816
        %v818 = vrcp.pop %v814
        %v819 = vmul.f32 %v814, %v818
        %v820 = vsub.f32 1.0, %v819
        %v821 = vmul.f32 %v818, %v820
        %v822 = vadd.f32 %v818, %v821
        %vm823 = vweird.f32 %v814
        %vm824 = vweird.f32 %v818
        %vm825 = vmor %vm823, %vm824
        %v826 = vsel %vm825, %v818, %v822
        %v827 = vand.u32 2147483647, %v814
        %vm828 = vcmp.eq.f32.partialorder %v827, 8.507059e+37
        %v829 = vand.u32 %v814, 2147483648
        %v830 = vor.u32 1.1754944e-38, %v829
        %v831 = vsel %vm828, %v830, %v826
        %v832 = vrcp.pop %v817
        %v833 = vmul.f32 %v817, %v832
        %v834 = vsub.f32 1.0, %v833
        %v835 = vmul.f32 %v832, %v834
        %v836 = vadd.f32 %v832, %v835
        %vm837 = vweird.f32 %v817
        %vm838 = vweird.f32 %v832
        %vm839 = vmor %vm837, %vm838
        %v840 = vsel %vm839, %v832, %v836
        %v841 = vand.u32 2147483647, %v817
        %vm842 = vcmp.eq.f32.partialorder %v841, 8.507059e+37
        %v843 = vand.u32 %v817, 2147483648
        %v844 = vor.u32 1.1754944e-38, %v843
        %v845 = vsel %vm842, %v844, %v840
        %v846 = vmul.f32 %v809, %v831
        %v847 = vmul.f32 %v811, %v845
        %848 = vrot.lane.b32.xlu0 %v421, 48
        %v849 = vpop.permute.xlu0 %848
        %v852 = vsel %vm426, %v846, 0
        %854 = vmatpush.msra.mxu0 0.0
        %855 = vmatpush.msra.mxu0 0.0
        %856 = vmatpush.msra.mxu0 0.0
        %857 = vmatpush.msra.mxu0 0.0
        %858 = vmatpush.msra.mxu0 0.0
        %859 = vmatpush.msra.mxu0 0.0
        %860 = vmatpush.msra.mxu0 0.0
        %861 = vmatpush.msra.mxu0 0.0
        %862 = vmatpush.msra.mxu0 0.0
        %863 = vmatpush.msra.mxu0 0.0
        %864 = vmatpush.msra.mxu0 0.0
        %865 = vmatpush.msra.mxu0 0.0
        %866 = vmatpush.msra.mxu0 0.0
        %867 = vmatpush.msra.mxu0 0.0
        %868 = vmatpush.msra.mxu0 0.0
        %869 = vmatpush.msra.mxu0 %v849
        %870 = vmatmul.f32.gmra.mxu0 %v852
        %v871 = vpop.f32.mrf.mxu0
        %v872 = vadd.f32 0.0, %v871
        %873 = vdwg.mxu0
        %874 = vrot.lane.b32.xlu0 %v422, 48
        %v875 = vpop.permute.xlu0 %874
        %v878 = vsel %vm426, %v847, 0
        %880 = vmatpush.msra.mxu0 0.0
        %881 = vmatpush.msra.mxu0 0.0
        %882 = vmatpush.msra.mxu0 0.0
        %883 = vmatpush.msra.mxu0 0.0
        %884 = vmatpush.msra.mxu0 0.0
        %885 = vmatpush.msra.mxu0 0.0
        %886 = vmatpush.msra.mxu0 0.0
        %887 = vmatpush.msra.mxu0 0.0
        %888 = vmatpush.msra.mxu0 0.0
        %889 = vmatpush.msra.mxu0 0.0
        %890 = vmatpush.msra.mxu0 0.0
        %891 = vmatpush.msra.mxu0 0.0
        %892 = vmatpush.msra.mxu0 0.0
        %893 = vmatpush.msra.mxu0 0.0
        %894 = vmatpush.msra.mxu0 0.0
        %895 = vmatpush.msra.mxu0 %v875
        %896 = vmatmul.f32.gmra.mxu0 %v878
        %v897 = vpop.f32.mrf.mxu0
        %v898 = vadd.f32 0.0, %v897
        %899 = vdwg.mxu0
        %900 = vrot.lane.b32.xlu0 %v407, 104
        %v901 = vpop.permute.xlu0 %900
        %902 = vrot.lane.b32.xlu0 %v414, 72
        %v903 = vpop.permute.xlu0 %902
        %v904 = vsel %vm426, %v901, 0
        %v906 = vsel %vm426, %v903, 0
        %908 = vmatpush.xpose.msra.mxu0 0.0
        %909 = vmatpush.xpose.msra.mxu0 0.0
        %910 = vmatpush.xpose.msra.mxu0 0.0
        %911 = vmatpush.xpose.msra.mxu0 0.0
        %912 = vmatpush.xpose.msra.mxu0 0.0
        %913 = vmatpush.xpose.msra.mxu0 0.0
        %914 = vmatpush.xpose.msra.mxu0 0.0
        %915 = vmatpush.xpose.msra.mxu0 0.0
        %916 = vmatpush.xpose.msra.mxu0 0.0
        %917 = vmatpush.xpose.msra.mxu0 0.0
        %918 = vmatpush.xpose.msra.mxu0 0.0
        %919 = vmatpush.xpose.msra.mxu0 0.0
        %920 = vmatpush.xpose.msra.mxu0 0.0
        %921 = vmatpush.xpose.msra.mxu0 0.0
        %922 = vmatpush.xpose.msra.mxu0 0.0
        %923 = vmatpush.xpose.msra.mxu0 %v906
        %924 = vmatmul.f32.gmra.mxu0 %v904
        %v925 = vpop.f32.mrf.mxu0
        %v926 = vadd.f32 0.0, %v925
        %927 = vdwg.mxu0
        %928 = vrot.lane.b32.xlu0 %v408, 104
        %v929 = vpop.permute.xlu0 %928
        %930 = vrot.lane.b32.xlu0 %v415, 72
        %v931 = vpop.permute.xlu0 %930
        %v932 = vsel %vm426, %v929, 0
        %v934 = vsel %vm426, %v931, 0
        %936 = vmatpush.xpose.msra.mxu0 0.0
        %937 = vmatpush.xpose.msra.mxu0 0.0
        %938 = vmatpush.xpose.msra.mxu0 0.0
        %939 = vmatpush.xpose.msra.mxu0 0.0
        %940 = vmatpush.xpose.msra.mxu0 0.0
        %941 = vmatpush.xpose.msra.mxu0 0.0
        %942 = vmatpush.xpose.msra.mxu0 0.0
        %943 = vmatpush.xpose.msra.mxu0 0.0
        %944 = vmatpush.xpose.msra.mxu0 0.0
        %945 = vmatpush.xpose.msra.mxu0 0.0
        %946 = vmatpush.xpose.msra.mxu0 0.0
        %947 = vmatpush.xpose.msra.mxu0 0.0
        %948 = vmatpush.xpose.msra.mxu0 0.0
        %949 = vmatpush.xpose.msra.mxu0 0.0
        %950 = vmatpush.xpose.msra.mxu0 0.0
        %951 = vmatpush.xpose.msra.mxu0 %v934
        %952 = vmatmul.f32.gmra.mxu0 %v932
        %v953 = vpop.f32.mrf.mxu0
        %v954 = vadd.f32 0.0, %v953
        %955 = vdwg.mxu0
        %v956 = vmul.f32 %v926, 0.35355338
        %v957 = vmul.f32 %v954, 0.35355338
        %v958 = vsel %vm426, %v956, -inf
        %959 = vmax.xlane.f32.xlu0 %v958
        %v960 = vpop.xlane.xlu0 %959
        %v961 = vsel %vm426, %v957, -inf
        %962 = vmax.xlane.f32.xlu0 %v961
        %v963 = vpop.xlane.xlu0 %962
        %v964 = vsub.f32 %v956, %v960
        %v965 = vsub.f32 %v957, %v963
        %v966 = vmul.f32 %v964, 1.442695
        %v967 = vpow.pop %v966
        %v968 = vmul.f32 %v965, 1.442695
        %v969 = vpow.pop %v968
        %v970 = vsel %vm426, %v967, 0.0
        %971 = vadd.xlane.f32.xlu0 %v970
        %v972 = vpop.xlane.xlu0 %971
        %v973 = vsel %vm426, %v969, 0.0
        %974 = vadd.xlane.f32.xlu0 %v973
        %v975 = vpop.xlane.xlu0 %974
        %v976 = vrcp.pop %v972
        %v977 = vmul.f32 %v972, %v976
        %v978 = vsub.f32 1.0, %v977
        %v979 = vmul.f32 %v976, %v978
        %v980 = vadd.f32 %v976, %v979
        %vm981 = vweird.f32 %v972
        %vm982 = vweird.f32 %v976
        %vm983 = vmor %vm981, %vm982
        %v984 = vsel %vm983, %v976, %v980
        %v985 = vand.u32 2147483647, %v972
        %vm986 = vcmp.eq.f32.partialorder %v985, 8.507059e+37
        %v987 = vand.u32 %v972, 2147483648
        %v988 = vor.u32 1.1754944e-38, %v987
        %v989 = vsel %vm986, %v988, %v984
        %v990 = vrcp.pop %v975
        %v991 = vmul.f32 %v975, %v990
        %v992 = vsub.f32 1.0, %v991
        %v993 = vmul.f32 %v990, %v992
        %v994 = vadd.f32 %v990, %v993
        %vm995 = vweird.f32 %v975
        %vm996 = vweird.f32 %v990
        %vm997 = vmor %vm995, %vm996
        %v998 = vsel %vm997, %v990, %v994
        %v999 = vand.u32 2147483647, %v975
        %vm1000 = vcmp.eq.f32.partialorder %v999, 8.507059e+37
        %v1001 = vand.u32 %v975, 2147483648
        %v1002 = vor.u32 1.1754944e-38, %v1001
        %v1003 = vsel %vm1000, %v1002, %v998
        %v1004 = vmul.f32 %v967, %v989
        %v1005 = vmul.f32 %v969, %v1003
        %1006 = vrot.lane.b32.xlu0 %v421, 40
        %v1007 = vpop.permute.xlu0 %1006
        %v1010 = vsel %vm426, %v1004, 0
        %1012 = vmatpush.msra.mxu0 0.0
        %1013 = vmatpush.msra.mxu0 0.0
        %1014 = vmatpush.msra.mxu0 0.0
        %1015 = vmatpush.msra.mxu0 0.0
        %1016 = vmatpush.msra.mxu0 0.0
        %1017 = vmatpush.msra.mxu0 0.0
        %1018 = vmatpush.msra.mxu0 0.0
        %1019 = vmatpush.msra.mxu0 0.0
        %1020 = vmatpush.msra.mxu0 0.0
        %1021 = vmatpush.msra.mxu0 0.0
        %1022 = vmatpush.msra.mxu0 0.0
        %1023 = vmatpush.msra.mxu0 0.0
        %1024 = vmatpush.msra.mxu0 0.0
        %1025 = vmatpush.msra.mxu0 0.0
        %1026 = vmatpush.msra.mxu0 0.0
        %1027 = vmatpush.msra.mxu0 %v1007
        %1028 = vmatmul.f32.gmra.mxu0 %v1010
        %v1029 = vpop.f32.mrf.mxu0
        %v1030 = vadd.f32 0.0, %v1029
        %1031 = vdwg.mxu0
        %1032 = vrot.lane.b32.xlu0 %v422, 40
        %v1033 = vpop.permute.xlu0 %1032
        %v1036 = vsel %vm426, %v1005, 0
        %1038 = vmatpush.msra.mxu0 0.0
        %1039 = vmatpush.msra.mxu0 0.0
        %1040 = vmatpush.msra.mxu0 0.0
        %1041 = vmatpush.msra.mxu0 0.0
        %1042 = vmatpush.msra.mxu0 0.0
        %1043 = vmatpush.msra.mxu0 0.0
        %1044 = vmatpush.msra.mxu0 0.0
        %1045 = vmatpush.msra.mxu0 0.0
        %1046 = vmatpush.msra.mxu0 0.0
        %1047 = vmatpush.msra.mxu0 0.0
        %1048 = vmatpush.msra.mxu0 0.0
        %1049 = vmatpush.msra.mxu0 0.0
        %1050 = vmatpush.msra.mxu0 0.0
        %1051 = vmatpush.msra.mxu0 0.0
        %1052 = vmatpush.msra.mxu0 0.0
        %1053 = vmatpush.msra.mxu0 %v1033
        %1054 = vmatmul.f32.gmra.mxu0 %v1036
        %v1055 = vpop.f32.mrf.mxu0
        %v1056 = vadd.f32 0.0, %v1055
        %1057 = vdwg.mxu0
        %1060 = vrot.lane.b32.xlu0 %v714, 8
        %v1061 = vpop.permute.xlu0 %1060
        %1062 = vrot.lane.b32.xlu0 %v740, 8
        %v1063 = vpop.permute.xlu0 %1062
        %1068 = vrot.lane.b32.xlu0 %v872, 16
        %v1069 = vpop.permute.xlu0 %1068
        %1070 = vrot.lane.b32.xlu0 %v898, 16
        %v1071 = vpop.permute.xlu0 %1070
        %1076 = vrot.lane.b32.xlu0 %v1030, 24
        %v1077 = vpop.permute.xlu0 %1076
        %1078 = vrot.lane.b32.xlu0 %v1056, 24
        %v1079 = vpop.permute.xlu0 %1078
        %v1082 = vsel %vm426, %v555, %v1061
        %v1083 = vsel %vm426, %v582, %v1063
        %vm1084 = vcmask 130048
        %v1085 = vsel %vm1084, %v1082, %v1069
        %v1086 = vsel %vm1084, %v1083, %v1071
        %vm1087 = vcmask 195584
        %v1088 = vsel %vm1087, %v1085, %v1077
        %v1089 = vsel %vm1087, %v1086, %v1079
        %v1090 = vld [vmem:[%s340] sm:$0xff]
        %v1091 = vld [vmem:[%s340 + $0x8] sm:$0xff]
        %v1092 = vld [vmem:[%s340 + $0x10] sm:$0xff]
        %v1093 = vld [vmem:[%s340 + $0x18] sm:$0xff]
        %v1094 = vperm.slane %v370, 3
        %v1096 = vsel %vm376, %v1088, 0
        %v1099 = vsel %vm376, %v1089, 0
        %1101 = vmatpush.msra.mxu0 0.0
        %1102 = vmatpush.msra.mxu0 0.0
        %1103 = vmatpush.msra.mxu0 0.0
        %1104 = vmatpush.msra.mxu0 0.0
        %1105 = vmatpush.msra.mxu0 0.0
        %1106 = vmatpush.msra.mxu0 0.0
        %1107 = vmatpush.msra.mxu0 0.0
        %1108 = vmatpush.msra.mxu0 0.0
        %1109 = vmatpush.msra.mxu0 0.0
        %1110 = vmatpush.msra.mxu0 0.0
        %1111 = vmatpush.msra.mxu0 0.0
        %1112 = vmatpush.msra.mxu0 0.0
        %1113 = vmatpush.msra.mxu0 %v1093
        %1114 = vmatpush.msra.mxu0 %v1092
        %1115 = vmatpush.msra.mxu0 %v1091
        %1116 = vmatpush.msra.mxu0 %v1090
        %1117 = vmatmul.f32.gmra.mxu0 %v1096
        %v1118 = vpop.f32.mrf.mxu0
        %v1119 = vadd.f32 %v1094, %v1118
        %1120 = vmatmul.f32.gmra.mxu0 %v1099
        %v1121 = vpop.f32.mrf.mxu0
        %v1122 = vadd.f32 %v1094, %v1121
        %1123 = vdwg.mxu0
        %v1124 = vadd.f32 %v1119, %v368
        %v1125 = vadd.f32 %v1122, %v369
        %v1126 = vsel %vm376, %v1124, 0.0
        %1127 = vadd.xlane.f32.xlu0 %v1126
        %v1128 = vpop.xlane.xlu0 %1127
        %v1129 = vsel %vm376, %v1125, 0.0
        %1130 = vadd.xlane.f32.xlu0 %v1129
        %v1131 = vpop.xlane.xlu0 %1130
        %v1132 = vrcp.pop 32.0
        %v1133 = vmul.f32 32.0, %v1132
        %v1134 = vsub.f32 1.0, %v1133
        %v1135 = vmul.f32 %v1132, %v1134
        %v1136 = vadd.f32 %v1132, %v1135
        %vm1137 = vweird.f32 %v1132
        %v1138 = vsel %vm1137, %v1132, %v1136
        %v1139 = vmul.f32 %v1128, %v1138
        %v1140 = vmul.f32 %v1131, %v1138
        %v1141 = vsub.f32 %v1124, %v1139
        %v1142 = vsub.f32 %v1125, %v1140
        %v1143 = vmul.f32 %v1141, %v1141
        %v1144 = vmul.f32 %v1142, %v1142
        %v1145 = vsel %vm376, %v1143, 0.0
        %1146 = vadd.xlane.f32.xlu0 %v1145
        %v1147 = vpop.xlane.xlu0 %1146
        %v1148 = vsel %vm376, %v1144, 0.0
        %1149 = vadd.xlane.f32.xlu0 %v1148
        %v1150 = vpop.xlane.xlu0 %1149
        %v1151 = vmul.f32 %v1147, %v1138
        %v1152 = vmul.f32 %v1150, %v1138
        %v1153 = vadd.f32 %v1151, 1e-05
        %v1154 = vadd.f32 %v1152, 1e-05
        %v1155 = vrsqrt.pop %v1153
        %v1156 = vmul.f32 %v1155, %v1153
        %v1157 = vmul.f32 %v1156, %v1155
        %v1158 = vmul.f32 0.5, %v1157
        %v1159 = vsub.f32 1.5, %v1158
        %v1160 = vmul.f32 %v1155, %v1159
        %vm1161 = vweird.f32 %v1153
        %vm1162 = vweird.f32 %v1155
        %vm1163 = vmor %vm1161, %vm1162
        %v1164 = vsel %vm1163, %v1155, %v1160
        %v1165 = vrsqrt.pop %v1154
        %v1166 = vmul.f32 %v1165, %v1154
        %v1167 = vmul.f32 %v1166, %v1165
        %v1168 = vmul.f32 0.5, %v1167
        %v1169 = vsub.f32 1.5, %v1168
        %v1170 = vmul.f32 %v1165, %v1169
        %vm1171 = vweird.f32 %v1154
        %vm1172 = vweird.f32 %v1165
        %vm1173 = vmor %vm1171, %vm1172
        %v1174 = vsel %vm1173, %v1165, %v1170
        %v1175 = vmul.f32 %v1141, %v1164
        %v1176 = vmul.f32 %v1142, %v1174
        %v1177 = vperm.slane %v370, 4
        %v1178 = vmul.f32 %v1175, %v1177
        %v1179 = vmul.f32 %v1176, %v1177
        %v1180 = vperm.slane %v370, 5
        %v1181 = vadd.f32 %v1178, %v1180
        %v1182 = vadd.f32 %v1179, %v1180
        %v1183 = vld [vmem:[%s345] sm:$0xff]
        %v1184 = vld [vmem:[%s345 + $0x8] sm:$0xff]
        %v1185 = vld [vmem:[%s345 + $0x10] sm:$0xff]
        %v1186 = vld [vmem:[%s345 + $0x18] sm:$0xff]
        %v1187 = vld [vmem:[%s358] sm:$0x1]
        %v1189 = vperm.slane %v1187, 0
        %v1192 = vsel %vm376, %v1181, 0
        %v1195 = vsel %vm376, %v1182, 0
        %1197 = vmatpush.msra.mxu0 0.0
        %1198 = vmatpush.msra.mxu0 0.0
        %1199 = vmatpush.msra.mxu0 0.0
        %1200 = vmatpush.msra.mxu0 0.0
        %1201 = vmatpush.msra.mxu0 0.0
        %1202 = vmatpush.msra.mxu0 0.0
        %1203 = vmatpush.msra.mxu0 0.0
        %1204 = vmatpush.msra.mxu0 0.0
        %1205 = vmatpush.msra.mxu0 0.0
        %1206 = vmatpush.msra.mxu0 0.0
        %1207 = vmatpush.msra.mxu0 0.0
        %1208 = vmatpush.msra.mxu0 0.0
        %1209 = vmatpush.msra.mxu0 %v1186
        %1210 = vmatpush.msra.mxu0 %v1185
        %1211 = vmatpush.msra.mxu0 %v1184
        %1212 = vmatpush.msra.mxu0 %v1183
        %1213 = vmatmul.f32.gmra.mxu0 %v1192
        %v1214 = vpop.f32.mrf.mxu0
        %v1215 = vadd.f32 %v1189, %v1214
        %1216 = vmatmul.f32.gmra.mxu0 %v1195
        %v1217 = vpop.f32.mrf.mxu0
        %v1218 = vadd.f32 %v1189, %v1217
        %1219 = vdwg.mxu0
        %v1220 = vmax.f32 %v1215, 0.0
        %v1221 = vmax.f32 %v1218, 0.0
        %v1222 = vld [vmem:[%s350] sm:$0xff]
        %v1223 = vld [vmem:[%s350 + $0x8] sm:$0xff]
        %v1224 = vld [vmem:[%s350 + $0x10] sm:$0xff]
        %v1225 = vld [vmem:[%s350 + $0x18] sm:$0xff]
        %v1226 = vld [vmem:[%s350 + $0x20] sm:$0xff]
        %v1227 = vld [vmem:[%s350 + $0x28] sm:$0xff]
        %v1228 = vld [vmem:[%s350 + $0x30] sm:$0xff]
        %v1229 = vld [vmem:[%s350 + $0x38] sm:$0xff]
        %v1230 = vld [vmem:[%s350 + $0x40] sm:$0xff]
        %v1231 = vld [vmem:[%s350 + $0x48] sm:$0xff]
        %v1232 = vld [vmem:[%s350 + $0x50] sm:$0xff]
        %v1233 = vld [vmem:[%s350 + $0x58] sm:$0xff]
        %v1234 = vld [vmem:[%s350 + $0x60] sm:$0xff]
        %v1235 = vld [vmem:[%s350 + $0x68] sm:$0xff]
        %v1236 = vld [vmem:[%s350 + $0x70] sm:$0xff]
        %v1237 = vld [vmem:[%s350 + $0x78] sm:$0xff]
        %v1238 = vperm.slane %v370, 6
        %1239 = vmatpush.msra.mxu0 %v1237
        %1240 = vmatpush.msra.mxu0 %v1236
        %1241 = vmatpush.msra.mxu0 %v1235
        %1242 = vmatpush.msra.mxu0 %v1234
        %1243 = vmatpush.msra.mxu0 %v1233
        %1244 = vmatpush.msra.mxu0 %v1232
        %1245 = vmatpush.msra.mxu0 %v1231
        %1246 = vmatpush.msra.mxu0 %v1230
        %1247 = vmatpush.msra.mxu0 %v1229
        %1248 = vmatpush.msra.mxu0 %v1228
        %1249 = vmatpush.msra.mxu0 %v1227
        %1250 = vmatpush.msra.mxu0 %v1226
        %1251 = vmatpush.msra.mxu0 %v1225
        %1252 = vmatpush.msra.mxu0 %v1224
        %1253 = vmatpush.msra.mxu0 %v1223
        %1254 = vmatpush.msra.mxu0 %v1222
        %1255 = vmatmul.f32.gmra.mxu0 %v1220
        %v1256 = vpop.f32.mrf.mxu0
        %v1257 = vadd.f32 %v1238, %v1256
        %1258 = vmatmul.f32.gmra.mxu0 %v1221
        %v1259 = vpop.f32.mrf.mxu0
        %v1260 = vadd.f32 %v1238, %v1259
        %1261 = vdwg.mxu0
        %v1262 = vadd.f32 %v1257, %v1181
        %v1263 = vadd.f32 %v1260, %v1182
        %v1264 = vsel %vm376, %v1262, 0.0
        %1265 = vadd.xlane.f32.xlu0 %v1264
        %v1266 = vpop.xlane.xlu0 %1265
        %v1267 = vsel %vm376, %v1263, 0.0
        %1268 = vadd.xlane.f32.xlu0 %v1267
        %v1269 = vpop.xlane.xlu0 %1268
        %v1270 = vmul.f32 %v1266, %v1138
        %v1271 = vmul.f32 %v1269, %v1138
        %v1272 = vsub.f32 %v1262, %v1270
        %v1273 = vsub.f32 %v1263, %v1271
        %v1274 = vmul.f32 %v1272, %v1272
        %v1275 = vmul.f32 %v1273, %v1273
        %v1276 = vsel %vm376, %v1274, 0.0
        %1277 = vadd.xlane.f32.xlu0 %v1276
        %v1278 = vpop.xlane.xlu0 %1277
        %v1279 = vsel %vm376, %v1275, 0.0
        %1280 = vadd.xlane.f32.xlu0 %v1279
        %v1281 = vpop.xlane.xlu0 %1280
        %v1282 = vmul.f32 %v1278, %v1138
        %v1283 = vmul.f32 %v1281, %v1138
        %v1284 = vadd.f32 %v1282, 1e-05
        %v1285 = vadd.f32 %v1283, 1e-05
        %v1286 = vrsqrt.pop %v1284
        %v1287 = vmul.f32 %v1286, %v1284
        %v1288 = vmul.f32 %v1287, %v1286
        %v1289 = vmul.f32 0.5, %v1288
        %v1290 = vsub.f32 1.5, %v1289
        %v1291 = vmul.f32 %v1286, %v1290
        %vm1292 = vweird.f32 %v1284
        %vm1293 = vweird.f32 %v1286
        %vm1294 = vmor %vm1292, %vm1293
        %v1295 = vsel %vm1294, %v1286, %v1291
        %v1296 = vrsqrt.pop %v1285
        %v1297 = vmul.f32 %v1296, %v1285
        %v1298 = vmul.f32 %v1297, %v1296
        %v1299 = vmul.f32 0.5, %v1298
        %v1300 = vsub.f32 1.5, %v1299
        %v1301 = vmul.f32 %v1296, %v1300
        %vm1302 = vweird.f32 %v1285
        %vm1303 = vweird.f32 %v1296
        %vm1304 = vmor %vm1302, %vm1303
        %v1305 = vsel %vm1304, %v1296, %v1301
        %v1306 = vmul.f32 %v1272, %v1295
        %v1307 = vmul.f32 %v1273, %v1305
        %v1308 = vperm.slane %v370, 7
        %v1309 = vmul.f32 %v1306, %v1308
        %v1310 = vmul.f32 %v1307, %v1308
        %v1311 = vperm.slane %v371, 0
        %v1312 = vadd.f32 %v1309, %v1311
        %v1313 = vadd.f32 %v1310, %v1311
        %1314 = vst.msk [vmem:[#allocation2] sm:$0xff] %vm376, %v1312
        %1315 = vst.msk [vmem:[#allocation2 + $0x8] sm:$0xff] %vm376, %v1313
        // Predicated region
        $region53: #{encoder_forward_pallas.1} parent=47 // pred_check
          %p1316 = pneg %p209
        $region54: #{encoder_forward_pallas.1} parent=47 // pred_check_branch
          %1318 = sbr.rel (%p1316) target = $region56
        $region55: #{encoder_forward_pallas.1} parent=47 // pred_region
          %1320 = vsyncadd [#allocation3], 0
          %s1321 = sshll.u32 [#allocation2], 4
          %s1322 = int_to_ptr.vmem [resolvable:$true] %s1321
          %s1323 = sshll.u32 %s7, 4
          %s1324 = int_to_ptr.hbm [resolvable:$true] %s1323
          %1329 = dma.vmem_to_hbm [thread:$0]  %s1322, 256, %s1324, [#allocation3], 128, 128, 8
        $region56: #{encoder_forward_pallas.1} parent=47 // pred_fallthru
          _
        // Predicated region
        $region57: #{encoder_forward_pallas.1} parent=47 // pred_check
          %p1330 = pneg %p209
        $region58: #{encoder_forward_pallas.1} parent=47 // pred_check_branch
          %1332 = sbr.rel (%p1330) target = $region60
        $region59: #{encoder_forward_pallas.1} parent=47 // pred_region
          %1334 = dma.done [#allocation3], 256
        $region60: #{encoder_forward_pallas.1} parent=47 // pred_fallthru
          _
      $region48: #{encoder_forward_pallas.1} parent=5 // pred_fallthru
        _
      %p1335 = scmp.le.s32.totalorder 2, %s14
      // Predicated region
      $region61: #{encoder_forward_pallas.1} parent=5 // pred_check
        %p1336 = pneg %p1335
      $region62: #{encoder_forward_pallas.1} parent=5 // pred_check_branch
        %1338 = sbr.rel (%p1336) target = $region64
      $region63: #{encoder_forward_pallas.1} parent=5 // pred_region
        %s1339 = ssub.s32 %s14, 2
      $region64: #{encoder_forward_pallas.1} parent=5 // pred_fallthru
        _
    $region6: #{encoder_forward_pallas.1} parent=1 // loop_footer
      %s18 = sadd.s32 1, %s14
    $region7: #{encoder_forward_pallas.1} parent=1 // loop_footer_branch
      %13 = sbr.rel target = $region3
    $region8: #{encoder_forward_pallas.1} parent=1 // loop_exit
      _
    %1340 = vsyncpa [#allocation3], 1
    %s1341 = scalar_lea.sflag [#allocation3], 1
    %1342 = vsyncpa %s1341, 1

</llo_original>
